<compile_context>
chip_gen: v5e
topology: v5e:2x2
jax: 0.10.0
libtpu: 0.0.40
codegen_flags: <defaults>
</compile_context>

<pallas_src>
import numpy as np
import jax
import jax.numpy as jnp
from jax.experimental import pallas as pl
from jax.experimental.pallas import tpu as pltpu

# ---------------- configuration (small demo shapes) ----------------
N, C, H, W = 2, 8, 16, 16
MID = C // 2
HW = H * W
B = N                # samples stacked per grid step (into the sublane/M axis)
BM = B * MID         # stacked mid-channel rows
BC = B * C           # stacked full-channel rows
PADP = 128           # each pooled grid zero-padded to one full lane tile
EPS = 1e-5
F32 = jnp.float32
BF16 = jnp.bfloat16

assert N % B == 0
assert HW == 2 * PADP  # kernel packs [z1 | z2] into an HW-wide slab (true for 16x16)


def _dot(a, b):
    return jnp.dot(a, b, preferred_element_type=jnp.float32)


# ---------------- host-side operator builders (one-time init) ----------------
def pool_matrix(size, k):
    """AvgPool2d(k, stride=k, padding=k//2, count_include_pad=True), one axis."""
    p = k // 2
    out = (size + 2 * p - k) // k + 1
    m = np.zeros((out, size), np.float32)
    for i in range(out):
        start = i * k - p
        for u in range(k):
            h = start + u
            if 0 <= h < size:
                m[i, h] = 1.0 / k
    return m


def shift_matrix(n, d):
    """(S @ x)[i] = x[i + d] if valid else 0 (zero padding)."""
    m = np.zeros((n, n), np.float32)
    for i in range(n):
        s = i + d
        if 0 <= s < n:
            m[i, s] = 1.0
    return m


def bilinear_matrix(out_size, in_size):
    """F.interpolate(mode='bilinear', align_corners=False) along one axis."""
    m = np.zeros((out_size, in_size), np.float32)
    scale = in_size / out_size
    for i in range(out_size):
        src = max((i + 0.5) * scale - 0.5, 0.0)
        i0 = min(int(np.floor(src)), in_size - 1)
        i1 = min(i0 + 1, in_size - 1)
        lam = src - i0
        m[i, i0] += 1.0 - lam
        m[i, i1] += lam
    return m


def _fold_bn_np(bn):
    gamma, beta, mean, var = [np.asarray(a, np.float32) for a in bn]
    sc = gamma / np.sqrt(var + EPS)
    sh = beta - mean * sc
    return sc, sh


def precompute_ops(p):
    """Fold BN / shuffle / conv weights into dense, lane-padded operators (host, once)."""
    # --- reduce 1x1 conv + bn_reduce + channel shuffle (row permutation) ---
    sc_r, sh_r = _fold_bn_np(p["bn_reduce"])
    cpg = MID // 2
    perm = np.array([(j % 2) * cpg + (j // 2) for j in range(MID)])
    w_red = np.asarray(p["w_reduce"], np.float32)
    Wr = sc_r[perm][:, None] * w_red[perm]                    # (MID, C)
    br = sh_r[perm]                                           # (MID,)
    Wr_blk = np.zeros((BM, BC), np.float32)                   # block-diag over B samples
    for n in range(B):
        Wr_blk[n * MID:(n + 1) * MID, n * C:(n + 1) * C] = Wr

    # --- merge 1x1 conv + bn_merge, arranged for upcat = [up1_stack ; up2_stack] ---
    sc_m, sh_m = _fold_bn_np(p["bn_merge"])
    w_mrg = np.asarray(p["w_merge"], np.float32)
    Wm1 = sc_m[:, None] * w_mrg[:, :MID]
    Wm2 = sc_m[:, None] * w_mrg[:, MID:]
    Wm_blk = np.zeros((BC, 2 * BM), np.float32)
    for n in range(B):
        Wm_blk[n * C:(n + 1) * C, n * MID:(n + 1) * MID] = Wm1
        Wm_blk[n * C:(n + 1) * C, BM + n * MID:BM + (n + 1) * MID] = Wm2

    # --- per-branch spatial operator: pool + per-tap shift + tap weight + BN scale
    #     folded per channel, each channel block zero-padded to PADP lanes ---
    def branch_ops(k, w_dw, bn):
        sc, sh = _fold_bn_np(bn)
        wd = sc[:, None] * np.asarray(w_dw, np.float32).reshape(MID, 9)
        Ph, Pw = pool_matrix(H, k), pool_matrix(W, k)
        Hp, Wp = Ph.shape[0], Pw.shape[0]
        P = Hp * Wp
        assert P <= PADP
        Ppool = np.kron(Ph, Pw)                               # (P, HW)
        Ac = np.zeros((HW, MID, PADP), np.float32)
        for dy in range(3):
            Sh = shift_matrix(Hp, dy - 1)
            for dx in range(3):
                Sw = shift_matrix(Wp, dx - 1)
                tap = (np.kron(Sh, Sw) @ Ppool).T             # (HW, P)
                for c in range(MID):
                    Ac[:, c, :P] += wd[c, dy * 3 + dx] * tap
        Uh, Uw = bilinear_matrix(H, Hp), bilinear_matrix(W, Wp)
        Kp = np.zeros((PADP, HW), np.float32)
        Kp[:P] = np.kron(Uh, Uw).T                            # (P, HW) upsample, padded
        return Ac.reshape(HW, MID * PADP), sh, Kp

    A1, bb1, K1 = branch_ops(3, p["w_dw1"], p["bn1"])
    A2, bb2, K2 = branch_ops(5, p["w_dw2"], p["bn2"])
    A_all = np.concatenate([A1, A2], axis=1)                  # (HW, 2*MID*PADP)
    K_all = np.concatenate([K1, K2], axis=0)                  # (2*PADP, HW)

    # --- selection mask: row n*MID+m keeps the channel-m block of each branch ---
    SEL = np.zeros((BM, 2 * MID * PADP), np.float32)
    for r in range(BM):
        m = r % MID
        SEL[r, m * PADP:(m + 1) * PADP] = 1.0
        SEL[r, (MID + m) * PADP:(MID + m + 1) * PADP] = 1.0

    # --- packed per-channel bias slab, pre-broadcast to HW lanes (one operand) ---
    bias = np.zeros((2 * BM + BC, HW), np.float32)
    for n in range(B):
        bias[n * MID:(n + 1) * MID, :] = br[:, None]                      # after reduce
        bias[BM + n * MID:BM + (n + 1) * MID, 0:PADP] = bb1[:, None]      # branch-1 BN shift
        bias[BM + n * MID:BM + (n + 1) * MID, PADP:2 * PADP] = bb2[:, None]
        bias[2 * BM + n * C:2 * BM + (n + 1) * C, :] = sh_m[:, None]      # merge BN shift

    return dict(
        Wr=jnp.asarray(Wr_blk, F32),
        bias=jnp.asarray(bias, F32),
        A=jnp.asarray(A_all, BF16),          # bf16 MXU path for the big matmuls
        SEL=jnp.asarray(SEL, F32),
        K=jnp.asarray(K_all, BF16),
        Wm=jnp.asarray(Wm_blk, F32),
        alpha=jnp.asarray(np.asarray(p["alpha"], np.float32).reshape(1), F32),
    )


# ---------------- fused Pallas kernel (whole batch per grid step) ----------------
def siunit_kernel(x_ref, wr_ref, bias_ref, a_ref, sel_ref, k_ref, wm_ref,
                  alpha_ref, o_ref):
    x = x_ref[...]                                            # (BC, HW) f32
    # reduce 1x1 conv + BN + channel shuffle (all folded, block-diag over samples)
    u = _dot(wr_ref[...], x) + bias_ref[0:BM, :]              # (BM, HW)
    # all 2*MID per-channel (pool + shifted-tap + BN-scale) operators in ONE matmul
    taps = _dot(u.astype(BF16), a_ref[...])                   # (BM, 2*MID*PADP) f32 acc
    masked = taps * sel_ref[...]                              # keep own-channel blocks
    z1 = masked[:, 0:PADP]
    z2 = masked[:, MID * PADP:(MID + 1) * PADP]
    for c in range(1, MID):                                   # aligned 128-lane blocks
        z1 = z1 + masked[:, c * PADP:(c + 1) * PADP]
        z2 = z2 + masked[:, (MID + c) * PADP:(MID + c + 1) * PADP]
    zc = jnp.concatenate([z1, z2], axis=1)                    # (BM, 2*PADP)
    zc = jnp.maximum(zc + bias_ref[BM:2 * BM, :], 0.0)        # + BN shift, ReLU
    zb = zc.astype(BF16)
    # bilinear upsample of each branch at M = B*MID (merge commuted to afterwards)
    up1 = _dot(zb[:, 0:PADP], k_ref[0:PADP, :])               # (BM, HW)
    up2 = _dot(zb[:, PADP:2 * PADP], k_ref[PADP:2 * PADP, :])
    upcat = jnp.concatenate([up1, up2], axis=0)               # (2*BM, HW)
    # merge 1x1 conv (+BN scale) on stacked branches + BN shift + identity
    y = _dot(wm_ref[...], upcat) + bias_ref[2 * BM:, :] + x   # (BC, HW)
    a = alpha_ref[0]
    o_ref[...] = jnp.where(y >= 0.0, y, a * y)                # PReLU (single alpha)


def siunit_pallas(x, ops):
    xs = x.reshape(N * C, HW)                                 # lane-dense (rows, 256)
    consts = [ops[k] for k in ("Wr", "bias", "A", "SEL", "K", "Wm")]
    in_specs = ([pl.BlockSpec((BC, HW), lambda i: (i, 0))]
                + [pl.BlockSpec(c.shape, lambda i: (0, 0)) for c in consts]
                + [pl.BlockSpec(memory_space=pltpu.MemorySpace.SMEM)])
    out = pl.pallas_call(
        siunit_kernel,
        out_shape=jax.ShapeDtypeStruct((N * C, HW), F32),
        grid=(N // B,),
        in_specs=in_specs,
        out_specs=pl.BlockSpec((BC, HW), lambda i: (i, 0)),
        compiler_params=pltpu.CompilerParams(
            dimension_semantics=("parallel",)),
    )(xs, *consts, ops["alpha"])
    return out.reshape(N, C, H, W)


siunit_forward = jax.jit(siunit_pallas)


# ---------------- parameters (deterministic, synthetic) ----------------
def bn_init(key, c):
    k1, k2, k3, k4 = jax.random.split(key, 4)
    gamma = 1.0 + 0.1 * jax.random.normal(k1, (c,), F32)
    beta = 0.1 * jax.random.normal(k2, (c,), F32)
    mean = 0.1 * jax.random.normal(k3, (c,), F32)
    var = 0.5 + jax.random.uniform(k4, (c,), F32)
    return gamma, beta, mean, var


def init_params(key):
    ks = jax.random.split(key, 8)
    return {
        "w_reduce": 0.3 * jax.random.normal(ks[0], (MID, C), F32),
        "bn_reduce": bn_init(ks[1], MID),
        "w_dw1": 0.3 * jax.random.normal(ks[2], (MID, 3, 3), F32),
        "bn1": bn_init(ks[3], MID),
        "w_dw2": 0.3 * jax.random.normal(ks[4], (MID, 3, 3), F32),
        "bn2": bn_init(ks[5], MID),
        "w_merge": 0.3 * jax.random.normal(ks[6], (C, 2 * MID), F32),
        "bn_merge": bn_init(ks[7], C),
        "alpha": jnp.float32(0.25),  # PReLU default init
    }


# ---------------- pure-JAX reference (for validation) ----------------
def _fold_bn_jax(bn):
    gamma, beta, mean, var = bn
    scale = gamma / jnp.sqrt(var + EPS)
    shift = beta - mean * scale
    return scale, shift


def _avgpool_ref(x, k):
    p = k // 2
    xp = jnp.pad(x, ((0, 0), (0, 0), (p, p), (p, p)))
    n, c, hp, wp = xp.shape
    return xp.reshape(n, c, hp // k, k, wp // k, k).mean(axis=(3, 5))


def reference_forward(x, p):
    sc_r, sh_r = _fold_bn_jax(p["bn_reduce"])
    u = (jnp.einsum("mc,nchw->nmhw", p["w_reduce"], x)
         * sc_r[None, :, None, None] + sh_r[None, :, None, None])
    b, m, h, w = u.shape
    u = u.reshape(b, 2, MID // 2, h, w).transpose(0, 2, 1, 3, 4).reshape(b, MID, h, w)

    def branch(k, w_dw, bn):
        sc, sh = _fold_bn_jax(bn)
        pooled = _avgpool_ref(u, k)
        d = jax.lax.conv_general_dilated(
            pooled, w_dw[:, None, :, :], (1, 1), ((1, 1), (1, 1)),
            dimension_numbers=("NCHW", "OIHW", "NCHW"),
            feature_group_count=MID)
        z = jnp.maximum(d * sc[None, :, None, None] + sh[None, :, None, None], 0.0)
        Uh = jnp.asarray(bilinear_matrix(H, z.shape[2]))
        Uw = jnp.asarray(bilinear_matrix(W, z.shape[3]))
        return jnp.einsum("hp,ncpq,wq->nchw", Uh, z, Uw)

    b1 = branch(3, p["w_dw1"], p["bn1"])
    b2 = branch(5, p["w_dw2"], p["bn2"])
    cat = jnp.concatenate([b1, b2], axis=1)
    sc_m, sh_m = _fold_bn_jax(p["bn_merge"])
    z = (jnp.einsum("oc,nchw->nohw", p["w_merge"], cat)
         * sc_m[None, :, None, None] + sh_m[None, :, None, None] + x)
    return jnp.where(z >= 0, z, p["alpha"] * z)


# ---------------- main ----------------
if __name__ == "__main__":
    key = jax.random.PRNGKey(0)
    kx, kp = jax.random.split(key)
    x = jax.random.normal(kx, (N, C, H, W), F32)
    params = init_params(kp)

    # one-time host precompute of all folded, lane-padded operators
    ops = precompute_ops(params)

    out = jax.block_until_ready(siunit_forward(x, ops))
    assert out.shape == (N, C, H, W)

    ref = reference_forward(x, params)
    np.testing.assert_allclose(np.asarray(out), np.asarray(ref),
                               rtol=2e-2, atol=2e-2)
    print("KERNEL_OK")
</pallas_src>

<mosaic_0001>
module attributes {stable_mosaic.version = 11 : i64} {
  func.func @siunit_kernel(%arg0: i32, %arg1: memref<16x256xf32, #tpu.memory_space<vmem>>, %arg2: memref<8x16xf32, #tpu.memory_space<vmem>>, %arg3: memref<32x256xf32, #tpu.memory_space<vmem>>, %arg4: memref<256x1024xbf16, #tpu.memory_space<vmem>>, %arg5: memref<8x1024xf32, #tpu.memory_space<vmem>>, %arg6: memref<256x256xbf16, #tpu.memory_space<vmem>>, %arg7: memref<16x16xf32, #tpu.memory_space<vmem>>, %arg8: memref<1xf32, #tpu.memory_space<smem>>, %arg9: memref<16x256xf32, #tpu.memory_space<vmem>>) attributes {dimension_semantics = [#tpu.dimension_semantics<parallel>], iteration_bounds = array<i64: 1>, scalar_prefetch = 0 : i64, scratch_operands = 0 : i64, tpu.core_type = #tpu.core_type<tc>, window_params = [{transform_indices = @transform_0, window_bounds = array<i64: 16, 256>}, {pipeline_mode = #tpu.pipeline_mode<synchronous>, transform_indices = @transform_1, window_bounds = array<i64: 8, 16>}, {pipeline_mode = #tpu.pipeline_mode<synchronous>, transform_indices = @transform_2, window_bounds = array<i64: 32, 256>}, {pipeline_mode = #tpu.pipeline_mode<synchronous>, transform_indices = @transform_3, window_bounds = array<i64: 256, 1024>}, {pipeline_mode = #tpu.pipeline_mode<synchronous>, transform_indices = @transform_4, window_bounds = array<i64: 8, 1024>}, {pipeline_mode = #tpu.pipeline_mode<synchronous>, transform_indices = @transform_5, window_bounds = array<i64: 256, 256>}, {pipeline_mode = #tpu.pipeline_mode<synchronous>, transform_indices = @transform_6, window_bounds = array<i64: 16, 16>}, {transform_indices = @transform_7, window_bounds = array<i64: 1>}, {transform_indices = @transform_8, window_bounds = array<i64: 16, 256>}]} {
    %c0 = arith.constant 0 : index
    %c0_0 = arith.constant 0 : index
    %0 = vector.load %arg1[%c0, %c0_0] : memref<16x256xf32, #tpu.memory_space<vmem>>, vector<16x256xf32>
    %c0_1 = arith.constant 0 : index
    %c0_2 = arith.constant 0 : index
    %1 = vector.load %arg2[%c0_1, %c0_2] : memref<8x16xf32, #tpu.memory_space<vmem>>, vector<8x16xf32>
    %cst = arith.constant dense<0.000000e+00> : vector<8x256xf32>
    %2 = tpu.matmul %1, %0, %cst {dimension_numbers = #tpu.dot_dimension_numbers<[1], [0], [0], [1], [0, 0, 1, 1], [], []>} : vector<8x16xf32>, vector<16x256xf32>, vector<8x256xf32> -> vector<8x256xf32>
    %c0_3 = arith.constant 0 : index
    %c0_4 = arith.constant 0 : index
    %3 = vector.load %arg3[%c0_3, %c0_4] : memref<32x256xf32, #tpu.memory_space<vmem>>, vector<8x256xf32>
    %4 = arith.addf %2, %3 : vector<8x256xf32>
    %5 = arith.truncf %4 : vector<8x256xf32> to vector<8x256xbf16>
    %c0_5 = arith.constant 0 : index
    %c0_6 = arith.constant 0 : index
    %6 = vector.load %arg4[%c0_5, %c0_6] : memref<256x1024xbf16, #tpu.memory_space<vmem>>, vector<256x1024xbf16>
    %cst_7 = arith.constant dense<0.000000e+00> : vector<8x1024xf32>
    %7 = tpu.matmul %5, %6, %cst_7 {dimension_numbers = #tpu.dot_dimension_numbers<[1], [0], [0], [1], [0, 0, 1, 1], [], []>} : vector<8x256xbf16>, vector<256x1024xbf16>, vector<8x1024xf32> -> vector<8x1024xf32>
    %c0_8 = arith.constant 0 : index
    %c0_9 = arith.constant 0 : index
    %8 = vector.load %arg5[%c0_8, %c0_9] : memref<8x1024xf32, #tpu.memory_space<vmem>>, vector<8x1024xf32>
    %9 = arith.mulf %7, %8 : vector<8x1024xf32>
    %10 = vector.extract_strided_slice %9 {offsets = [0, 0], sizes = [8, 128], strides = [1, 1]} : vector<8x1024xf32> to vector<8x128xf32>
    %11 = vector.extract_strided_slice %9 {offsets = [0, 512], sizes = [8, 128], strides = [1, 1]} : vector<8x1024xf32> to vector<8x128xf32>
    %12 = vector.extract_strided_slice %9 {offsets = [0, 128], sizes = [8, 128], strides = [1, 1]} : vector<8x1024xf32> to vector<8x128xf32>
    %13 = arith.addf %10, %12 : vector<8x128xf32>
    %14 = vector.extract_strided_slice %9 {offsets = [0, 640], sizes = [8, 128], strides = [1, 1]} : vector<8x1024xf32> to vector<8x128xf32>
    %15 = arith.addf %11, %14 : vector<8x128xf32>
    %16 = vector.extract_strided_slice %9 {offsets = [0, 256], sizes = [8, 128], strides = [1, 1]} : vector<8x1024xf32> to vector<8x128xf32>
    %17 = arith.addf %13, %16 : vector<8x128xf32>
    %18 = vector.extract_strided_slice %9 {offsets = [0, 768], sizes = [8, 128], strides = [1, 1]} : vector<8x1024xf32> to vector<8x128xf32>
    %19 = arith.addf %15, %18 : vector<8x128xf32>
    %20 = vector.extract_strided_slice %9 {offsets = [0, 384], sizes = [8, 128], strides = [1, 1]} : vector<8x1024xf32> to vector<8x128xf32>
    %21 = arith.addf %17, %20 : vector<8x128xf32>
    %22 = vector.extract_strided_slice %9 {offsets = [0, 896], sizes = [8, 128], strides = [1, 1]} : vector<8x1024xf32> to vector<8x128xf32>
    %23 = arith.addf %19, %22 : vector<8x128xf32>
    %24 = tpu.concatenate %21, %23 in 1 : vector<8x128xf32>, vector<8x128xf32> -> vector<8x256xf32>
    %c8 = arith.constant 8 : index
    %c0_10 = arith.constant 0 : index
    %25 = vector.load %arg3[%c8, %c0_10] : memref<32x256xf32, #tpu.memory_space<vmem>>, vector<8x256xf32>
    %26 = arith.addf %24, %25 : vector<8x256xf32>
    %cst_11 = arith.constant 0.000000e+00 : f32
    %27 = vector.broadcast %cst_11 : f32 to vector<8x256xf32>
    %28 = arith.maximumf %26, %27 : vector<8x256xf32>
    %29 = arith.truncf %28 : vector<8x256xf32> to vector<8x256xbf16>
    %30 = vector.extract_strided_slice %29 {offsets = [0, 0], sizes = [8, 128], strides = [1, 1]} : vector<8x256xbf16> to vector<8x128xbf16>
    %c0_12 = arith.constant 0 : index
    %c0_13 = arith.constant 0 : index
    %31 = vector.load %arg6[%c0_12, %c0_13] : memref<256x256xbf16, #tpu.memory_space<vmem>>, vector<128x256xbf16>
    %cst_14 = arith.constant dense<0.000000e+00> : vector<8x256xf32>
    %32 = tpu.matmul %30, %31, %cst_14 {dimension_numbers = #tpu.dot_dimension_numbers<[1], [0], [0], [1], [0, 0, 1, 1], [], []>} : vector<8x128xbf16>, vector<128x256xbf16>, vector<8x256xf32> -> vector<8x256xf32>
    %33 = vector.extract_strided_slice %29 {offsets = [0, 128], sizes = [8, 128], strides = [1, 1]} : vector<8x256xbf16> to vector<8x128xbf16>
    %c128 = arith.constant 128 : index
    %c0_15 = arith.constant 0 : index
    %34 = vector.load %arg6[%c128, %c0_15] : memref<256x256xbf16, #tpu.memory_space<vmem>>, vector<128x256xbf16>
    %cst_16 = arith.constant dense<0.000000e+00> : vector<8x256xf32>
    %35 = tpu.matmul %33, %34, %cst_16 {dimension_numbers = #tpu.dot_dimension_numbers<[1], [0], [0], [1], [0, 0, 1, 1], [], []>} : vector<8x128xbf16>, vector<128x256xbf16>, vector<8x256xf32> -> vector<8x256xf32>
    %36 = tpu.concatenate %32, %35 in 0 : vector<8x256xf32>, vector<8x256xf32> -> vector<16x256xf32>
    %c0_17 = arith.constant 0 : index
    %c0_18 = arith.constant 0 : index
    %37 = vector.load %arg7[%c0_17, %c0_18] : memref<16x16xf32, #tpu.memory_space<vmem>>, vector<16x16xf32>
    %cst_19 = arith.constant dense<0.000000e+00> : vector<16x256xf32>
    %38 = tpu.matmul %37, %36, %cst_19 {dimension_numbers = #tpu.dot_dimension_numbers<[1], [0], [0], [1], [0, 0, 1, 1], [], []>} : vector<16x16xf32>, vector<16x256xf32>, vector<16x256xf32> -> vector<16x256xf32>
    %c16 = arith.constant 16 : index
    %c0_20 = arith.constant 0 : index
    %39 = vector.load %arg3[%c16, %c0_20] : memref<32x256xf32, #tpu.memory_space<vmem>>, vector<16x256xf32>
    %40 = arith.addf %38, %39 : vector<16x256xf32>
    %41 = arith.addf %40, %0 : vector<16x256xf32>
    %c0_21 = arith.constant 0 : index
    %42 = memref.load %arg8[%c0_21] : memref<1xf32, #tpu.memory_space<smem>>
    %cst_22 = arith.constant 0.000000e+00 : f32
    %43 = vector.broadcast %cst_22 : f32 to vector<16x256xf32>
    %44 = arith.cmpf oge, %41, %43 : vector<16x256xf32>
    %45 = vector.broadcast %42 : f32 to vector<16x256xf32>
    %46 = arith.mulf %45, %41 : vector<16x256xf32>
    %47 = arith.select %44, %41, %46 : vector<16x256xi1>, vector<16x256xf32>
    %c0_23 = arith.constant 0 : index
    %c0_24 = arith.constant 0 : index
    %48 = vector.load %arg9[%c0_23, %c0_24] : memref<16x256xf32, #tpu.memory_space<vmem>>, vector<16x256xf32>
    tpu.vector_store %arg9[%c0_23, %c0_24], %47 {strides = array<i32>} : memref<16x256xf32, #tpu.memory_space<vmem>>, vector<16x256xf32>,
    return
  }
  func.func @transform_0(%arg0: i32) -> (i32, i32) {
    %c0_i32 = arith.constant 0 : i32
    %c0_i32_0 = arith.constant 0 : i32
    return %arg0, %c0_i32 : i32, i32
  }
  func.func @transform_1(%arg0: i32) -> (i32, i32) {
    %c0_i32 = arith.constant 0 : i32
    %c0_i32_0 = arith.constant 0 : i32
    %c0_i32_1 = arith.constant 0 : i32
    return %c0_i32, %c0_i32_0 : i32, i32
  }
  func.func @transform_2(%arg0: i32) -> (i32, i32) {
    %c0_i32 = arith.constant 0 : i32
    %c0_i32_0 = arith.constant 0 : i32
    %c0_i32_1 = arith.constant 0 : i32
    return %c0_i32, %c0_i32_0 : i32, i32
  }
  func.func @transform_3(%arg0: i32) -> (i32, i32) {
    %c0_i32 = arith.constant 0 : i32
    %c0_i32_0 = arith.constant 0 : i32
    %c0_i32_1 = arith.constant 0 : i32
    return %c0_i32, %c0_i32_0 : i32, i32
  }
  func.func @transform_4(%arg0: i32) -> (i32, i32) {
    %c0_i32 = arith.constant 0 : i32
    %c0_i32_0 = arith.constant 0 : i32
    %c0_i32_1 = arith.constant 0 : i32
    return %c0_i32, %c0_i32_0 : i32, i32
  }
  func.func @transform_5(%arg0: i32) -> (i32, i32) {
    %c0_i32 = arith.constant 0 : i32
    %c0_i32_0 = arith.constant 0 : i32
    %c0_i32_1 = arith.constant 0 : i32
    return %c0_i32, %c0_i32_0 : i32, i32
  }
  func.func @transform_6(%arg0: i32) -> (i32, i32) {
    %c0_i32 = arith.constant 0 : i32
    %c0_i32_0 = arith.constant 0 : i32
    %c0_i32_1 = arith.constant 0 : i32
    return %c0_i32, %c0_i32_0 : i32, i32
  }
  func.func @transform_7(%arg0: i32) -> i32 {
    %c0_i32 = arith.constant 0 : i32
    %c0_i32_0 = arith.constant 0 : i32
    return %c0_i32 : i32
  }
  func.func @transform_8(%arg0: i32) -> (i32, i32) {
    %c0_i32 = arith.constant 0 : i32
    %c0_i32_0 = arith.constant 0 : i32
    return %arg0, %c0_i32 : i32, i32
  }
}

</mosaic_0001>

<llo_original>
// kernel: siunit_pallas.1
$region0: #{siunit_pallas.1}
  #allocation0 [shape = 'u32[]', space=smem, size = 0x4, offset = 0x4, fixed_abs, tag = 'smem constant byte address 0x4 - core index']
  #allocation1 [shape = 'u32[72,128]{1,0:T(1,128)}', space=vmem, size = 0x9000, scoped, tag = 'internal scratch']
  #allocation2 [shape = 'f32[1]{0:T(128)S(6)}', space=smem, size = 0x200, scoped, tag = 'scoped memory for siunit_pallas.1']
  %s0 = inlined_call_operand.vmem [shape: f32[16,256], index: 0, kind: input, shape index: {}]
  %s1 = inlined_call_operand.vmem [shape: f32[8,16], index: 1, kind: input, shape index: {}]
  %s2 = inlined_call_operand.hbm [shape: f32[32,256], index: 2, kind: input, shape index: {}]
  %s3 = inlined_call_operand.hbm [shape: bf16[256,1024], index: 3, kind: input, shape index: {}]
  %s4 = inlined_call_operand.hbm [shape: f32[8,1024], index: 4, kind: input, shape index: {}]
  %s5 = inlined_call_operand.vmem [shape: bf16[256,256], index: 5, kind: input, shape index: {}]
  %s6 = inlined_call_operand.vmem [shape: f32[16,16], index: 6, kind: input, shape index: {}]
  %s7 = inlined_call_operand.<no memory space> [shape: f32[1], index: 7, kind: input, shape index: {}]
  %s8 = inlined_call_operand.vmem [shape: f32[16,256], index: 8, kind: output, shape index: {}]
  %s9 = sld [smem:[#allocation0]]
  $region54: #{siunit_pallas.1} parent=0
    _
  %s11 = ssub.s32 1, %s9
  %s12 = scalar_select 0, %s11, %s9
  %13 = sst [smem:[#allocation2]] %s7
  $region1: #{siunit_pallas.1} parent=0
    #allocation3 [shape = 'u8[32768]{0}', space=vmem, size = 0x8000, scoped, tag = 'input window, operand 2, single buffered']
    #allocation4 [shape = 's32[1]{0}', space=sflag, size = 0x4, scoped, tag = 'scoped memory for siunit_pallas.1']
    #allocation5 [shape = 'u8[524288]{0}', space=vmem, size = 0x80000, scoped, tag = 'input window, operand 3, single buffered']
    #allocation6 [shape = 's32[1]{0}', space=sflag, size = 0x4, scoped, tag = 'scoped memory for siunit_pallas.1']
    #allocation7 [shape = 'u8[32768]{0}', space=vmem, size = 0x8000, scoped, tag = 'input window, operand 4, single buffered']
    %14 = vsyncpa [#allocation4], 0
    %15 = vsyncpa [#allocation6], 0
    // Predicated region
    $region2: #{siunit_pallas.1} parent=1 // pred_check
      _
    $region3: #{siunit_pallas.1} parent=1 // pred_check_branch
      %17 = sbr.rel (0) target = $region5
    $region4: #{siunit_pallas.1} parent=1 // pred_region
      _
    $region5: #{siunit_pallas.1} parent=1 // pred_fallthru
      _
    // Predicated region
    $region6: #{siunit_pallas.1} parent=1 // pred_check
      _
    $region7: #{siunit_pallas.1} parent=1 // pred_check_branch
      %19 = sbr.rel (0) target = $region9
    $region8: #{siunit_pallas.1} parent=1 // pred_region
      _
    $region9: #{siunit_pallas.1} parent=1 // pred_fallthru
      _
    // Predicated region
    $region10: #{siunit_pallas.1} parent=1 // pred_check
      _
    $region11: #{siunit_pallas.1} parent=1 // pred_check_branch
      %21 = sbr.rel (0) target = $region13
    $region12: #{siunit_pallas.1} parent=1 // pred_region
      %23 = vsyncadd [#allocation4], 0
      %s24 = sshll.u32 %s2, 4
      %s25 = int_to_ptr.hbm [resolvable:$true] %s24
      %s26 = sshll.u32 [#allocation3], 4
      %s27 = int_to_ptr.vmem [resolvable:$true] %s26
      %32 = dma.hbm_to_vmem [thread:$0]  %s25, 1024, %s27, [#allocation4], 256, 256, 16
    $region13: #{siunit_pallas.1} parent=1 // pred_fallthru
      _
    // Predicated region
    $region14: #{siunit_pallas.1} parent=1 // pred_check
      _
    $region15: #{siunit_pallas.1} parent=1 // pred_check_branch
      %34 = sbr.rel (0) target = $region17
    $region16: #{siunit_pallas.1} parent=1 // pred_region
      %36 = vsyncadd [#allocation6], 0
      %s37 = sshll.u32 %s3, 4
      %s38 = int_to_ptr.hbm [resolvable:$true] %s37
      %s39 = sshll.u32 [#allocation5], 4
      %s40 = int_to_ptr.vmem [resolvable:$true] %s39
      %45 = dma.hbm_to_vmem [thread:$0]  %s38, 16384, %s40, [#allocation6], 512, 512, 32
    $region17: #{siunit_pallas.1} parent=1 // pred_fallthru
      _
    // Predicated region
    $region18: #{siunit_pallas.1} parent=1 // pred_check
      _
    $region19: #{siunit_pallas.1} parent=1 // pred_check_branch
      %47 = sbr.rel (0) target = $region21
    $region20: #{siunit_pallas.1} parent=1 // pred_region
      %49 = vsyncadd [#allocation6], 0
      %s51 = sshll.u32 %s4, 4
      %s52 = int_to_ptr.hbm [resolvable:$true] %s51
      %s53 = sshll.u32 [#allocation7], 4
      %s54 = int_to_ptr.vmem [resolvable:$true] %s53
      %56 = dma.hbm_to_vmem [thread:$0]  %s52, 1024, %s54, [#allocation6]
    $region21: #{siunit_pallas.1} parent=1 // pred_fallthru
      _
    // Predicated region
    $region22: #{siunit_pallas.1} parent=1 // pred_check
      _
    $region23: #{siunit_pallas.1} parent=1 // pred_check_branch
      %58 = sbr.rel (0) target = $region25
    $region24: #{siunit_pallas.1} parent=1 // pred_region
      _
    $region25: #{siunit_pallas.1} parent=1 // pred_fallthru
      _
    // Predicated region
    $region26: #{siunit_pallas.1} parent=1 // pred_check
      _
    $region27: #{siunit_pallas.1} parent=1 // pred_check_branch
      %60 = sbr.rel (0) target = $region29
    $region28: #{siunit_pallas.1} parent=1 // pred_region
      _
    $region29: #{siunit_pallas.1} parent=1 // pred_fallthru
      _
    // Predicated region
    $region30: #{siunit_pallas.1} parent=1 // pred_check
      _
    $region31: #{siunit_pallas.1} parent=1 // pred_check_branch
      %62 = sbr.rel (0) target = $region33
    $region32: #{siunit_pallas.1} parent=1 // pred_region
      _
    $region33: #{siunit_pallas.1} parent=1 // pred_fallthru
      _
    // Predicated region
    $region34: #{siunit_pallas.1} parent=1 // pred_check
      _
    $region35: #{siunit_pallas.1} parent=1 // pred_check_branch
      %64 = sbr.rel (0) target = $region37
    $region36: #{siunit_pallas.1} parent=1 // pred_region
      %66 = dma.done [#allocation4], 1024
    $region37: #{siunit_pallas.1} parent=1 // pred_fallthru
      _
    // Predicated region
    $region38: #{siunit_pallas.1} parent=1 // pred_check
      _
    $region39: #{siunit_pallas.1} parent=1 // pred_check_branch
      %68 = sbr.rel (0) target = $region41
    $region40: #{siunit_pallas.1} parent=1 // pred_region
      %70 = dma.done [#allocation6], 16384
    $region41: #{siunit_pallas.1} parent=1 // pred_fallthru
      _
    // Predicated region
    $region42: #{siunit_pallas.1} parent=1 // pred_check
      _
    $region43: #{siunit_pallas.1} parent=1 // pred_check_branch
      %72 = sbr.rel (0) target = $region45
    $region44: #{siunit_pallas.1} parent=1 // pred_region
      %74 = dma.done [#allocation6], 1024
    $region45: #{siunit_pallas.1} parent=1 // pred_fallthru
      _
    %v75 = vld [vmem:[%s0] sm:$0xff]
    %v76 = vld [vmem:[%s0 + $0x8] sm:$0xff]
    %v77 = vld [vmem:[%s0 + $0x10] sm:$0xff]
    %v78 = vld [vmem:[%s0 + $0x18] sm:$0xff]
    %v79 = vld [vmem:[%s1] sm:$0xff]
    %v80 = vld [vmem:[#allocation3] sm:$0xff]
    %v81 = vld [vmem:[#allocation3 + $0x8] sm:$0xff]
    %vm82 = vcmask 130048
    %v84 = vsel %vm82, %v79, 0
    %86 = vmatpush.msra.mxu0 0.0
    %87 = vmatpush.msra.mxu0 0.0
    %88 = vmatpush.msra.mxu0 0.0
    %89 = vmatpush.msra.mxu0 0.0
    %90 = vmatpush.msra.mxu0 0.0
    %91 = vmatpush.msra.mxu0 0.0
    %92 = vmatpush.msra.mxu0 0.0
    %93 = vmatpush.msra.mxu0 0.0
    %94 = vmatpush.msra.mxu0 0.0
    %95 = vmatpush.msra.mxu0 0.0
    %96 = vmatpush.msra.mxu0 0.0
    %97 = vmatpush.msra.mxu0 0.0
    %98 = vmatpush.msra.mxu0 0.0
    %99 = vmatpush.msra.mxu0 0.0
    %100 = vmatpush.msra.mxu0 %v77
    %101 = vmatpush.msra.mxu0 %v75
    %102 = vmatmul.f32.gmra.mxu0 %v84
    %v103 = vpop.f32.mrf.mxu0
    %v104 = vadd.f32 %v80, %v103
    %105 = vdwg.mxu0
    %106 = vmatpush.msra.mxu0 0.0
    %107 = vmatpush.msra.mxu0 0.0
    %108 = vmatpush.msra.mxu0 0.0
    %109 = vmatpush.msra.mxu0 0.0
    %110 = vmatpush.msra.mxu0 0.0
    %111 = vmatpush.msra.mxu0 0.0
    %112 = vmatpush.msra.mxu0 0.0
    %113 = vmatpush.msra.mxu0 0.0
    %114 = vmatpush.msra.mxu0 0.0
    %115 = vmatpush.msra.mxu0 0.0
    %116 = vmatpush.msra.mxu0 0.0
    %117 = vmatpush.msra.mxu0 0.0
    %118 = vmatpush.msra.mxu0 0.0
    %119 = vmatpush.msra.mxu0 0.0
    %120 = vmatpush.msra.mxu0 %v78
    %121 = vmatpush.msra.mxu0 %v76
    %122 = vmatmul.f32.gmra.mxu0 %v84
    %v123 = vpop.f32.mrf.mxu0
    %v124 = vadd.f32 %v81, %v123
    %125 = vdwg.mxu0
    %v126 = vpack.c.bf16 %v104, %v104
    %v127 = vpack.c.bf16 %v124, %v124
    %v128 = vld [vmem:[#allocation5] sm:$0xff]
    %v129 = vld [vmem:[#allocation5 + $0x8] sm:$0xff]
    %v130 = vld [vmem:[#allocation5 + $0x10] sm:$0xff]
    %v131 = vld [vmem:[#allocation5 + $0x18] sm:$0xff]
    %v132 = vld [vmem:[#allocation5 + $0x20] sm:$0xff]
    %v133 = vld [vmem:[#allocation5 + $0x28] sm:$0xff]
    %v134 = vld [vmem:[#allocation5 + $0x30] sm:$0xff]
    %v135 = vld [vmem:[#allocation5 + $0x38] sm:$0xff]
    %v136 = vld [vmem:[#allocation5 + $0x40] sm:$0xff]
    %v137 = vld [vmem:[#allocation5 + $0x48] sm:$0xff]
    %v138 = vld [vmem:[#allocation5 + $0x50] sm:$0xff]
    %v139 = vld [vmem:[#allocation5 + $0x58] sm:$0xff]
    %v140 = vld [vmem:[#allocation5 + $0x60] sm:$0xff]
    %v141 = vld [vmem:[#allocation5 + $0x68] sm:$0xff]
    %v142 = vld [vmem:[#allocation5 + $0x70] sm:$0xff]
    %v143 = vld [vmem:[#allocation5 + $0x78] sm:$0xff]
    %v144 = vld [vmem:[#allocation5 + $0x80] sm:$0xff]
    %v145 = vld [vmem:[#allocation5 + $0x88] sm:$0xff]
    %v146 = vld [vmem:[#allocation5 + $0x90] sm:$0xff]
    %v147 = vld [vmem:[#allocation5 + $0x98] sm:$0xff]
    %v148 = vld [vmem:[#allocation5 + $0xa0] sm:$0xff]
    %v149 = vld [vmem:[#allocation5 + $0xa8] sm:$0xff]
    %v150 = vld [vmem:[#allocation5 + $0xb0] sm:$0xff]
    %v151 = vld [vmem:[#allocation5 + $0xb8] sm:$0xff]
    %v152 = vld [vmem:[#allocation5 + $0xc0] sm:$0xff]
    %v153 = vld [vmem:[#allocation5 + $0xc8] sm:$0xff]
    %v154 = vld [vmem:[#allocation5 + $0xd0] sm:$0xff]
    %v155 = vld [vmem:[#allocation5 + $0xd8] sm:$0xff]
    %v156 = vld [vmem:[#allocation5 + $0xe0] sm:$0xff]
    %v157 = vld [vmem:[#allocation5 + $0xe8] sm:$0xff]
    %v158 = vld [vmem:[#allocation5 + $0xf0] sm:$0xff]
    %v159 = vld [vmem:[#allocation5 + $0xf8] sm:$0xff]
    %v160 = vld [vmem:[#allocation5 + $0x100] sm:$0xff]
    %v161 = vld [vmem:[#allocation5 + $0x108] sm:$0xff]
    %v162 = vld [vmem:[#allocation5 + $0x110] sm:$0xff]
    %v163 = vld [vmem:[#allocation5 + $0x118] sm:$0xff]
    %v164 = vld [vmem:[#allocation5 + $0x120] sm:$0xff]
    %v165 = vld [vmem:[#allocation5 + $0x128] sm:$0xff]
    %v166 = vld [vmem:[#allocation5 + $0x130] sm:$0xff]
    %v167 = vld [vmem:[#allocation5 + $0x138] sm:$0xff]
    %v168 = vld [vmem:[#allocation5 + $0x140] sm:$0xff]
    %v169 = vld [vmem:[#allocation5 + $0x148] sm:$0xff]
    %v170 = vld [vmem:[#allocation5 + $0x150] sm:$0xff]
    %v171 = vld [vmem:[#allocation5 + $0x158] sm:$0xff]
    %v172 = vld [vmem:[#allocation5 + $0x160] sm:$0xff]
    %v173 = vld [vmem:[#allocation5 + $0x168] sm:$0xff]
    %v174 = vld [vmem:[#allocation5 + $0x170] sm:$0xff]
    %v175 = vld [vmem:[#allocation5 + $0x178] sm:$0xff]
    %v176 = vld [vmem:[#allocation5 + $0x180] sm:$0xff]
    %v177 = vld [vmem:[#allocation5 + $0x188] sm:$0xff]
    %v178 = vld [vmem:[#allocation5 + $0x190] sm:$0xff]
    %v179 = vld [vmem:[#allocation5 + $0x198] sm:$0xff]
    %v180 = vld [vmem:[#allocation5 + $0x1a0] sm:$0xff]
    %v181 = vld [vmem:[#allocation5 + $0x1a8] sm:$0xff]
    %v182 = vld [vmem:[#allocation5 + $0x1b0] sm:$0xff]
    %v183 = vld [vmem:[#allocation5 + $0x1b8] sm:$0xff]
    %v184 = vld [vmem:[#allocation5 + $0x1c0] sm:$0xff]
    %v185 = vld [vmem:[#allocation5 + $0x1c8] sm:$0xff]
    %v186 = vld [vmem:[#allocation5 + $0x1d0] sm:$0xff]
    %v187 = vld [vmem:[#allocation5 + $0x1d8] sm:$0xff]
    %v188 = vld [vmem:[#allocation5 + $0x1e0] sm:$0xff]
    %v189 = vld [vmem:[#allocation5 + $0x1e8] sm:$0xff]
    %v190 = vld [vmem:[#allocation5 + $0x1f0] sm:$0xff]
    %v191 = vld [vmem:[#allocation5 + $0x1f8] sm:$0xff]
    %v192 = vld [vmem:[#allocation5 + $0x200] sm:$0xff]
    %v193 = vld [vmem:[#allocation5 + $0x208] sm:$0xff]
    %v194 = vld [vmem:[#allocation5 + $0x210] sm:$0xff]
    %v195 = vld [vmem:[#allocation5 + $0x218] sm:$0xff]
    %v196 = vld [vmem:[#allocation5 + $0x220] sm:$0xff]
    %v197 = vld [vmem:[#allocation5 + $0x228] sm:$0xff]
    %v198 = vld [vmem:[#allocation5 + $0x230] sm:$0xff]
    %v199 = vld [vmem:[#allocation5 + $0x238] sm:$0xff]
    %v200 = vld [vmem:[#allocation5 + $0x240] sm:$0xff]
    %v201 = vld [vmem:[#allocation5 + $0x248] sm:$0xff]
    %v202 = vld [vmem:[#allocation5 + $0x250] sm:$0xff]
    %v203 = vld [vmem:[#allocation5 + $0x258] sm:$0xff]
    %v204 = vld [vmem:[#allocation5 + $0x260] sm:$0xff]
    %v205 = vld [vmem:[#allocation5 + $0x268] sm:$0xff]
    %v206 = vld [vmem:[#allocation5 + $0x270] sm:$0xff]
    %v207 = vld [vmem:[#allocation5 + $0x278] sm:$0xff]
    %v208 = vld [vmem:[#allocation5 + $0x280] sm:$0xff]
    %v209 = vld [vmem:[#allocation5 + $0x288] sm:$0xff]
    %v210 = vld [vmem:[#allocation5 + $0x290] sm:$0xff]
    %v211 = vld [vmem:[#allocation5 + $0x298] sm:$0xff]
    %v212 = vld [vmem:[#allocation5 + $0x2a0] sm:$0xff]
    %v213 = vld [vmem:[#allocation5 + $0x2a8] sm:$0xff]
    %v214 = vld [vmem:[#allocation5 + $0x2b0] sm:$0xff]
    %v215 = vld [vmem:[#allocation5 + $0x2b8] sm:$0xff]
    %v216 = vld [vmem:[#allocation5 + $0x2c0] sm:$0xff]
    %v217 = vld [vmem:[#allocation5 + $0x2c8] sm:$0xff]
    %v218 = vld [vmem:[#allocation5 + $0x2d0] sm:$0xff]
    %v219 = vld [vmem:[#allocation5 + $0x2d8] sm:$0xff]
    %v220 = vld [vmem:[#allocation5 + $0x2e0] sm:$0xff]
    %v221 = vld [vmem:[#allocation5 + $0x2e8] sm:$0xff]
    %v222 = vld [vmem:[#allocation5 + $0x2f0] sm:$0xff]
    %v223 = vld [vmem:[#allocation5 + $0x2f8] sm:$0xff]
    %v224 = vld [vmem:[#allocation5 + $0x300] sm:$0xff]
    %v225 = vld [vmem:[#allocation5 + $0x308] sm:$0xff]
    %v226 = vld [vmem:[#allocation5 + $0x310] sm:$0xff]
    %v227 = vld [vmem:[#allocation5 + $0x318] sm:$0xff]
    %v228 = vld [vmem:[#allocation5 + $0x320] sm:$0xff]
    %v229 = vld [vmem:[#allocation5 + $0x328] sm:$0xff]
    %v230 = vld [vmem:[#allocation5 + $0x330] sm:$0xff]
    %v231 = vld [vmem:[#allocation5 + $0x338] sm:$0xff]
    %v232 = vld [vmem:[#allocation5 + $0x340] sm:$0xff]
    %v233 = vld [vmem:[#allocation5 + $0x348] sm:$0xff]
    %v234 = vld [vmem:[#allocation5 + $0x350] sm:$0xff]
    %v235 = vld [vmem:[#allocation5 + $0x358] sm:$0xff]
    %v236 = vld [vmem:[#allocation5 + $0x360] sm:$0xff]
    %v237 = vld [vmem:[#allocation5 + $0x368] sm:$0xff]
    %v238 = vld [vmem:[#allocation5 + $0x370] sm:$0xff]
    %v239 = vld [vmem:[#allocation5 + $0x378] sm:$0xff]
    %v240 = vld [vmem:[#allocation5 + $0x380] sm:$0xff]
    %v241 = vld [vmem:[#allocation5 + $0x388] sm:$0xff]
    %v242 = vld [vmem:[#allocation5 + $0x390] sm:$0xff]
    %v243 = vld [vmem:[#allocation5 + $0x398] sm:$0xff]
    %v244 = vld [vmem:[#allocation5 + $0x3a0] sm:$0xff]
    %v245 = vld [vmem:[#allocation5 + $0x3a8] sm:$0xff]
    %v246 = vld [vmem:[#allocation5 + $0x3b0] sm:$0xff]
    %v247 = vld [vmem:[#allocation5 + $0x3b8] sm:$0xff]
    %v248 = vld [vmem:[#allocation5 + $0x3c0] sm:$0xff]
    %v249 = vld [vmem:[#allocation5 + $0x3c8] sm:$0xff]
    %v250 = vld [vmem:[#allocation5 + $0x3d0] sm:$0xff]
    %v251 = vld [vmem:[#allocation5 + $0x3d8] sm:$0xff]
    %v252 = vld [vmem:[#allocation5 + $0x3e0] sm:$0xff]
    %v253 = vld [vmem:[#allocation5 + $0x3e8] sm:$0xff]
    %v254 = vld [vmem:[#allocation5 + $0x3f0] sm:$0xff]
    %v255 = vld [vmem:[#allocation5 + $0x3f8] sm:$0xff]
    %v384 = vunpack.c.l.b16 %v128
    %v385 = vunpack.c.h.b16 %v128
    %v386 = vunpack.c.l.b16 %v129
    %v387 = vunpack.c.h.b16 %v129
    %v388 = vunpack.c.l.b16 %v130
    %v389 = vunpack.c.h.b16 %v130
    %v390 = vunpack.c.l.b16 %v131
    %v391 = vunpack.c.h.b16 %v131
    %v392 = vunpack.c.l.b16 %v132
    %v393 = vunpack.c.h.b16 %v132
    %v394 = vunpack.c.l.b16 %v133
    %v395 = vunpack.c.h.b16 %v133
    %v396 = vunpack.c.l.b16 %v134
    %v397 = vunpack.c.h.b16 %v134
    %v398 = vunpack.c.l.b16 %v135
    %v399 = vunpack.c.h.b16 %v135
    %v400 = vunpack.c.l.b16 %v136
    %v401 = vunpack.c.h.b16 %v136
    %v402 = vunpack.c.l.b16 %v137
    %v403 = vunpack.c.h.b16 %v137
    %v404 = vunpack.c.l.b16 %v138
    %v405 = vunpack.c.h.b16 %v138
    %v406 = vunpack.c.l.b16 %v139
    %v407 = vunpack.c.h.b16 %v139
    %v408 = vunpack.c.l.b16 %v140
    %v409 = vunpack.c.h.b16 %v140
    %v410 = vunpack.c.l.b16 %v141
    %v411 = vunpack.c.h.b16 %v141
    %v412 = vunpack.c.l.b16 %v142
    %v413 = vunpack.c.h.b16 %v142
    %v414 = vunpack.c.l.b16 %v143
    %v415 = vunpack.c.h.b16 %v143
    %v416 = vunpack.c.l.b16 %v144
    %v417 = vunpack.c.h.b16 %v144
    %v418 = vunpack.c.l.b16 %v145
    %v419 = vunpack.c.h.b16 %v145
    %v420 = vunpack.c.l.b16 %v146
    %v421 = vunpack.c.h.b16 %v146
    %v422 = vunpack.c.l.b16 %v147
    %v423 = vunpack.c.h.b16 %v147
    %v424 = vunpack.c.l.b16 %v148
    %v425 = vunpack.c.h.b16 %v148
    %v426 = vunpack.c.l.b16 %v149
    %v427 = vunpack.c.h.b16 %v149
    %v428 = vunpack.c.l.b16 %v150
    %v429 = vunpack.c.h.b16 %v150
    %v430 = vunpack.c.l.b16 %v151
    %v431 = vunpack.c.h.b16 %v151
    %v432 = vunpack.c.l.b16 %v152
    %v433 = vunpack.c.h.b16 %v152
    %v434 = vunpack.c.l.b16 %v153
    %v435 = vunpack.c.h.b16 %v153
    %v436 = vunpack.c.l.b16 %v154
    %v437 = vunpack.c.h.b16 %v154
    %v438 = vunpack.c.l.b16 %v155
    %v439 = vunpack.c.h.b16 %v155
    %v440 = vunpack.c.l.b16 %v156
    %v441 = vunpack.c.h.b16 %v156
    %v442 = vunpack.c.l.b16 %v157
    %v443 = vunpack.c.h.b16 %v157
    %v444 = vunpack.c.l.b16 %v158
    %v445 = vunpack.c.h.b16 %v158
    %v446 = vunpack.c.l.b16 %v159
    %v447 = vunpack.c.h.b16 %v159
    %v448 = vunpack.c.l.b16 %v160
    %v449 = vunpack.c.h.b16 %v160
    %v450 = vunpack.c.l.b16 %v161
    %v451 = vunpack.c.h.b16 %v161
    %v452 = vunpack.c.l.b16 %v162
    %v453 = vunpack.c.h.b16 %v162
    %v454 = vunpack.c.l.b16 %v163
    %v455 = vunpack.c.h.b16 %v163
    %v456 = vunpack.c.l.b16 %v164
    %v457 = vunpack.c.h.b16 %v164
    %v458 = vunpack.c.l.b16 %v165
    %v459 = vunpack.c.h.b16 %v165
    %v460 = vunpack.c.l.b16 %v166
    %v461 = vunpack.c.h.b16 %v166
    %v462 = vunpack.c.l.b16 %v167
    %v463 = vunpack.c.h.b16 %v167
    %v464 = vunpack.c.l.b16 %v168
    %v465 = vunpack.c.h.b16 %v168
    %v466 = vunpack.c.l.b16 %v169
    %v467 = vunpack.c.h.b16 %v169
    %v468 = vunpack.c.l.b16 %v170
    %v469 = vunpack.c.h.b16 %v170
    %v470 = vunpack.c.l.b16 %v171
    %v471 = vunpack.c.h.b16 %v171
    %v472 = vunpack.c.l.b16 %v172
    %v473 = vunpack.c.h.b16 %v172
    %v474 = vunpack.c.l.b16 %v173
    %v475 = vunpack.c.h.b16 %v173
    %v476 = vunpack.c.l.b16 %v174
    %v477 = vunpack.c.h.b16 %v174
    %v478 = vunpack.c.l.b16 %v175
    %v479 = vunpack.c.h.b16 %v175
    %v480 = vunpack.c.l.b16 %v176
    %v481 = vunpack.c.h.b16 %v176
    %v482 = vunpack.c.l.b16 %v177
    %v483 = vunpack.c.h.b16 %v177
    %v484 = vunpack.c.l.b16 %v178
    %v485 = vunpack.c.h.b16 %v178
    %v486 = vunpack.c.l.b16 %v179
    %v487 = vunpack.c.h.b16 %v179
    %v488 = vunpack.c.l.b16 %v180
    %v489 = vunpack.c.h.b16 %v180
    %v490 = vunpack.c.l.b16 %v181
    %v491 = vunpack.c.h.b16 %v181
    %v492 = vunpack.c.l.b16 %v182
    %v493 = vunpack.c.h.b16 %v182
    %v494 = vunpack.c.l.b16 %v183
    %v495 = vunpack.c.h.b16 %v183
    %v496 = vunpack.c.l.b16 %v184
    %v497 = vunpack.c.h.b16 %v184
    %v498 = vunpack.c.l.b16 %v185
    %v499 = vunpack.c.h.b16 %v185
    %v500 = vunpack.c.l.b16 %v186
    %v501 = vunpack.c.h.b16 %v186
    %v502 = vunpack.c.l.b16 %v187
    %v503 = vunpack.c.h.b16 %v187
    %v504 = vunpack.c.l.b16 %v188
    %v505 = vunpack.c.h.b16 %v188
    %v506 = vunpack.c.l.b16 %v189
    %v507 = vunpack.c.h.b16 %v189
    %v508 = vunpack.c.l.b16 %v190
    %v509 = vunpack.c.h.b16 %v190
    %v510 = vunpack.c.l.b16 %v191
    %v511 = vunpack.c.h.b16 %v191
    %v512 = vunpack.c.l.b16 %v192
    %v513 = vunpack.c.h.b16 %v192
    %v514 = vunpack.c.l.b16 %v193
    %v515 = vunpack.c.h.b16 %v193
    %v516 = vunpack.c.l.b16 %v194
    %v517 = vunpack.c.h.b16 %v194
    %v518 = vunpack.c.l.b16 %v195
    %v519 = vunpack.c.h.b16 %v195
    %v520 = vunpack.c.l.b16 %v196
    %v521 = vunpack.c.h.b16 %v196
    %v522 = vunpack.c.l.b16 %v197
    %v523 = vunpack.c.h.b16 %v197
    %v524 = vunpack.c.l.b16 %v198
    %v525 = vunpack.c.h.b16 %v198
    %v526 = vunpack.c.l.b16 %v199
    %v527 = vunpack.c.h.b16 %v199
    %v528 = vunpack.c.l.b16 %v200
    %v529 = vunpack.c.h.b16 %v200
    %v530 = vunpack.c.l.b16 %v201
    %v531 = vunpack.c.h.b16 %v201
    %v532 = vunpack.c.l.b16 %v202
    %v533 = vunpack.c.h.b16 %v202
    %v534 = vunpack.c.l.b16 %v203
    %v535 = vunpack.c.h.b16 %v203
    %v536 = vunpack.c.l.b16 %v204
    %v537 = vunpack.c.h.b16 %v204
    %v538 = vunpack.c.l.b16 %v205
    %v539 = vunpack.c.h.b16 %v205
    %v540 = vunpack.c.l.b16 %v206
    %v541 = vunpack.c.h.b16 %v206
    %v542 = vunpack.c.l.b16 %v207
    %v543 = vunpack.c.h.b16 %v207
    %v544 = vunpack.c.l.b16 %v208
    %v545 = vunpack.c.h.b16 %v208
    %v546 = vunpack.c.l.b16 %v209
    %v547 = vunpack.c.h.b16 %v209
    %v548 = vunpack.c.l.b16 %v210
    %v549 = vunpack.c.h.b16 %v210
    %v550 = vunpack.c.l.b16 %v211
    %v551 = vunpack.c.h.b16 %v211
    %v552 = vunpack.c.l.b16 %v212
    %v553 = vunpack.c.h.b16 %v212
    %v554 = vunpack.c.l.b16 %v213
    %v555 = vunpack.c.h.b16 %v213
    %v556 = vunpack.c.l.b16 %v214
    %v557 = vunpack.c.h.b16 %v214
    %v558 = vunpack.c.l.b16 %v215
    %v559 = vunpack.c.h.b16 %v215
    %v560 = vunpack.c.l.b16 %v216
    %v561 = vunpack.c.h.b16 %v216
    %v562 = vunpack.c.l.b16 %v217
    %v563 = vunpack.c.h.b16 %v217
    %v564 = vunpack.c.l.b16 %v218
    %v565 = vunpack.c.h.b16 %v218
    %v566 = vunpack.c.l.b16 %v219
    %v567 = vunpack.c.h.b16 %v219
    %v568 = vunpack.c.l.b16 %v220
    %v569 = vunpack.c.h.b16 %v220
    %v570 = vunpack.c.l.b16 %v221
    %v571 = vunpack.c.h.b16 %v221
    %v572 = vunpack.c.l.b16 %v222
    %v573 = vunpack.c.h.b16 %v222
    %v574 = vunpack.c.l.b16 %v223
    %v575 = vunpack.c.h.b16 %v223
    %v576 = vunpack.c.l.b16 %v224
    %v577 = vunpack.c.h.b16 %v224
    %v578 = vunpack.c.l.b16 %v225
    %v579 = vunpack.c.h.b16 %v225
    %v580 = vunpack.c.l.b16 %v226
    %v581 = vunpack.c.h.b16 %v226
    %v582 = vunpack.c.l.b16 %v227
    %v583 = vunpack.c.h.b16 %v227
    %v584 = vunpack.c.l.b16 %v228
    %v585 = vunpack.c.h.b16 %v228
    %v586 = vunpack.c.l.b16 %v229
    %v587 = vunpack.c.h.b16 %v229
    %v588 = vunpack.c.l.b16 %v230
    %v589 = vunpack.c.h.b16 %v230
    %v590 = vunpack.c.l.b16 %v231
    %v591 = vunpack.c.h.b16 %v231
    %v592 = vunpack.c.l.b16 %v232
    %v593 = vunpack.c.h.b16 %v232
    %v594 = vunpack.c.l.b16 %v233
    %v595 = vunpack.c.h.b16 %v233
    %v596 = vunpack.c.l.b16 %v234
    %v597 = vunpack.c.h.b16 %v234
    %v598 = vunpack.c.l.b16 %v235
    %v599 = vunpack.c.h.b16 %v235
    %v600 = vunpack.c.l.b16 %v236
    %v601 = vunpack.c.h.b16 %v236
    %v602 = vunpack.c.l.b16 %v237
    %v603 = vunpack.c.h.b16 %v237
    %v604 = vunpack.c.l.b16 %v238
    %v605 = vunpack.c.h.b16 %v238
    %v606 = vunpack.c.l.b16 %v239
    %v607 = vunpack.c.h.b16 %v239
    %v608 = vunpack.c.l.b16 %v240
    %v609 = vunpack.c.h.b16 %v240
    %v610 = vunpack.c.l.b16 %v241
    %v611 = vunpack.c.h.b16 %v241
    %v612 = vunpack.c.l.b16 %v242
    %v613 = vunpack.c.h.b16 %v242
    %v614 = vunpack.c.l.b16 %v243
    %v615 = vunpack.c.h.b16 %v243
    %v616 = vunpack.c.l.b16 %v244
    %v617 = vunpack.c.h.b16 %v244
    %v618 = vunpack.c.l.b16 %v245
    %v619 = vunpack.c.h.b16 %v245
    %v620 = vunpack.c.l.b16 %v246
    %v621 = vunpack.c.h.b16 %v246
    %v622 = vunpack.c.l.b16 %v247
    %v623 = vunpack.c.h.b16 %v247
    %v624 = vunpack.c.l.b16 %v248
    %v625 = vunpack.c.h.b16 %v248
    %v626 = vunpack.c.l.b16 %v249
    %v627 = vunpack.c.h.b16 %v249
    %v628 = vunpack.c.l.b16 %v250
    %v629 = vunpack.c.h.b16 %v250
    %v630 = vunpack.c.l.b16 %v251
    %v631 = vunpack.c.h.b16 %v251
    %v632 = vunpack.c.l.b16 %v252
    %v633 = vunpack.c.h.b16 %v252
    %v634 = vunpack.c.l.b16 %v253
    %v635 = vunpack.c.h.b16 %v253
    %v636 = vunpack.c.l.b16 %v254
    %v637 = vunpack.c.h.b16 %v254
    %v638 = vunpack.c.l.b16 %v255
    %v639 = vunpack.c.h.b16 %v255
    %v640 = vpack.c.b16 %v392, %v384
    %v641 = vpack.c.b16 %v393, %v385
    %v642 = vpack.c.b16 %v394, %v386
    %v643 = vpack.c.b16 %v395, %v387
    %v644 = vpack.c.b16 %v396, %v388
    %v645 = vpack.c.b16 %v397, %v389
    %v646 = vpack.c.b16 %v398, %v390
    %v647 = vpack.c.b16 %v399, %v391
    %v648 = vpack.c.b16 %v408, %v400
    %v649 = vpack.c.b16 %v409, %v401
    %v650 = vpack.c.b16 %v410, %v402
    %v651 = vpack.c.b16 %v411, %v403
    %v652 = vpack.c.b16 %v412, %v404
    %v653 = vpack.c.b16 %v413, %v405
    %v654 = vpack.c.b16 %v414, %v406
    %v655 = vpack.c.b16 %v415, %v407
    %v656 = vpack.c.b16 %v424, %v416
    %v657 = vpack.c.b16 %v425, %v417
    %v658 = vpack.c.b16 %v426, %v418
    %v659 = vpack.c.b16 %v427, %v419
    %v660 = vpack.c.b16 %v428, %v420
    %v661 = vpack.c.b16 %v429, %v421
    %v662 = vpack.c.b16 %v430, %v422
    %v663 = vpack.c.b16 %v431, %v423
    %v664 = vpack.c.b16 %v440, %v432
    %v665 = vpack.c.b16 %v441, %v433
    %v666 = vpack.c.b16 %v442, %v434
    %v667 = vpack.c.b16 %v443, %v435
    %v668 = vpack.c.b16 %v444, %v436
    %v669 = vpack.c.b16 %v445, %v437
    %v670 = vpack.c.b16 %v446, %v438
    %v671 = vpack.c.b16 %v447, %v439
    %v672 = vpack.c.b16 %v456, %v448
    %v673 = vpack.c.b16 %v457, %v449
    %v674 = vpack.c.b16 %v458, %v450
    %v675 = vpack.c.b16 %v459, %v451
    %v676 = vpack.c.b16 %v460, %v452
    %v677 = vpack.c.b16 %v461, %v453
    %v678 = vpack.c.b16 %v462, %v454
    %v679 = vpack.c.b16 %v463, %v455
    %v680 = vpack.c.b16 %v472, %v464
    %v681 = vpack.c.b16 %v473, %v465
    %v682 = vpack.c.b16 %v474, %v466
    %v683 = vpack.c.b16 %v475, %v467
    %v684 = vpack.c.b16 %v476, %v468
    %v685 = vpack.c.b16 %v477, %v469
    %v686 = vpack.c.b16 %v478, %v470
    %v687 = vpack.c.b16 %v479, %v471
    %v688 = vpack.c.b16 %v488, %v480
    %v689 = vpack.c.b16 %v489, %v481
    %v690 = vpack.c.b16 %v490, %v482
    %v691 = vpack.c.b16 %v491, %v483
    %v692 = vpack.c.b16 %v492, %v484
    %v693 = vpack.c.b16 %v493, %v485
    %v694 = vpack.c.b16 %v494, %v486
    %v695 = vpack.c.b16 %v495, %v487
    %v696 = vpack.c.b16 %v504, %v496
    %v697 = vpack.c.b16 %v505, %v497
    %v698 = vpack.c.b16 %v506, %v498
    %v699 = vpack.c.b16 %v507, %v499
    %v700 = vpack.c.b16 %v508, %v500
    %v701 = vpack.c.b16 %v509, %v501
    %v702 = vpack.c.b16 %v510, %v502
    %v703 = vpack.c.b16 %v511, %v503
    %v704 = vpack.c.b16 %v520, %v512
    %v705 = vpack.c.b16 %v521, %v513
    %v706 = vpack.c.b16 %v522, %v514
    %v707 = vpack.c.b16 %v523, %v515
    %v708 = vpack.c.b16 %v524, %v516
    %v709 = vpack.c.b16 %v525, %v517
    %v710 = vpack.c.b16 %v526, %v518
    %v711 = vpack.c.b16 %v527, %v519
    %v712 = vpack.c.b16 %v536, %v528
    %v713 = vpack.c.b16 %v537, %v529
    %v714 = vpack.c.b16 %v538, %v530
    %v715 = vpack.c.b16 %v539, %v531
    %v716 = vpack.c.b16 %v540, %v532
    %v717 = vpack.c.b16 %v541, %v533
    %v718 = vpack.c.b16 %v542, %v534
    %v719 = vpack.c.b16 %v543, %v535
    %v720 = vpack.c.b16 %v552, %v544
    %v721 = vpack.c.b16 %v553, %v545
    %v722 = vpack.c.b16 %v554, %v546
    %v723 = vpack.c.b16 %v555, %v547
    %v724 = vpack.c.b16 %v556, %v548
    %v725 = vpack.c.b16 %v557, %v549
    %v726 = vpack.c.b16 %v558, %v550
    %v727 = vpack.c.b16 %v559, %v551
    %v728 = vpack.c.b16 %v568, %v560
    %v729 = vpack.c.b16 %v569, %v561
    %v730 = vpack.c.b16 %v570, %v562
    %v731 = vpack.c.b16 %v571, %v563
    %v732 = vpack.c.b16 %v572, %v564
    %v733 = vpack.c.b16 %v573, %v565
    %v734 = vpack.c.b16 %v574, %v566
    %v735 = vpack.c.b16 %v575, %v567
    %v736 = vpack.c.b16 %v584, %v576
    %v737 = vpack.c.b16 %v585, %v577
    %v738 = vpack.c.b16 %v586, %v578
    %v739 = vpack.c.b16 %v587, %v579
    %v740 = vpack.c.b16 %v588, %v580
    %v741 = vpack.c.b16 %v589, %v581
    %v742 = vpack.c.b16 %v590, %v582
    %v743 = vpack.c.b16 %v591, %v583
    %v744 = vpack.c.b16 %v600, %v592
    %v745 = vpack.c.b16 %v601, %v593
    %v746 = vpack.c.b16 %v602, %v594
    %v747 = vpack.c.b16 %v603, %v595
    %v748 = vpack.c.b16 %v604, %v596
    %v749 = vpack.c.b16 %v605, %v597
    %v750 = vpack.c.b16 %v606, %v598
    %v751 = vpack.c.b16 %v607, %v599
    %v752 = vpack.c.b16 %v616, %v608
    %v753 = vpack.c.b16 %v617, %v609
    %v754 = vpack.c.b16 %v618, %v610
    %v755 = vpack.c.b16 %v619, %v611
    %v756 = vpack.c.b16 %v620, %v612
    %v757 = vpack.c.b16 %v621, %v613
    %v758 = vpack.c.b16 %v622, %v614
    %v759 = vpack.c.b16 %v623, %v615
    %v760 = vpack.c.b16 %v632, %v624
    %v761 = vpack.c.b16 %v633, %v625
    %v762 = vpack.c.b16 %v634, %v626
    %v763 = vpack.c.b16 %v635, %v627
    %v764 = vpack.c.b16 %v636, %v628
    %v765 = vpack.c.b16 %v637, %v629
    %v766 = vpack.c.b16 %v638, %v630
    %v767 = vpack.c.b16 %v639, %v631
    %896 = vmatpush.bf16.msra.mxu0 %v696
    %897 = vmatpush.bf16.msra.mxu0 %v688
    %898 = vmatpush.bf16.msra.mxu0 %v680
    %899 = vmatpush.bf16.msra.mxu0 %v672
    %900 = vmatpush.bf16.msra.mxu0 %v664
    %901 = vmatpush.bf16.msra.mxu0 %v656
    %902 = vmatpush.bf16.msra.mxu0 %v648
    %903 = vmatpush.bf16.msra.mxu0 %v640
    %904 = vmatmul.bf16.gmra.mxu0 %v126
    %v905 = vpop.f32.mrf.mxu0
    %v906 = vadd.f32 0.0, %v905
    %v907 = vpop.f32.mrf.mxu0
    %908 = vdwg.mxu0
    %909 = vmatpush.bf16.msra.mxu0 %v760
    %910 = vmatpush.bf16.msra.mxu0 %v752
    %911 = vmatpush.bf16.msra.mxu0 %v744
    %912 = vmatpush.bf16.msra.mxu0 %v736
    %913 = vmatpush.bf16.msra.mxu0 %v728
    %914 = vmatpush.bf16.msra.mxu0 %v720
    %915 = vmatpush.bf16.msra.mxu0 %v712
    %916 = vmatpush.bf16.msra.mxu0 %v704
    %917 = vmatmul.bf16.gmra.mxu0 %v127
    %v918 = vpop.f32.mrf.mxu0
    %v919 = vadd.f32 %v906, %v918
    %v920 = vpop.f32.mrf.mxu0
    %921 = vdwg.mxu0
    %922 = vmatpush.bf16.msra.mxu0 %v697
    %923 = vmatpush.bf16.msra.mxu0 %v689
    %924 = vmatpush.bf16.msra.mxu0 %v681
    %925 = vmatpush.bf16.msra.mxu0 %v673
    %926 = vmatpush.bf16.msra.mxu0 %v665
    %927 = vmatpush.bf16.msra.mxu0 %v657
    %928 = vmatpush.bf16.msra.mxu0 %v649
    %929 = vmatpush.bf16.msra.mxu0 %v641
    %930 = vmatmul.bf16.gmra.mxu0 %v126
    %v931 = vpop.f32.mrf.mxu0
    %v932 = vadd.f32 0.0, %v931
    %v933 = vpop.f32.mrf.mxu0
    %934 = vdwg.mxu0
    %935 = vmatpush.bf16.msra.mxu0 %v761
    %936 = vmatpush.bf16.msra.mxu0 %v753
    %937 = vmatpush.bf16.msra.mxu0 %v745
    %938 = vmatpush.bf16.msra.mxu0 %v737
    %939 = vmatpush.bf16.msra.mxu0 %v729
    %940 = vmatpush.bf16.msra.mxu0 %v721
    %941 = vmatpush.bf16.msra.mxu0 %v713
    %942 = vmatpush.bf16.msra.mxu0 %v705
    %943 = vmatmul.bf16.gmra.mxu0 %v127
    %v944 = vpop.f32.mrf.mxu0
    %v945 = vadd.f32 %v932, %v944
    %v946 = vpop.f32.mrf.mxu0
    %947 = vdwg.mxu0
    %948 = vmatpush.bf16.msra.mxu0 %v698
    %949 = vmatpush.bf16.msra.mxu0 %v690
    %950 = vmatpush.bf16.msra.mxu0 %v682
    %951 = vmatpush.bf16.msra.mxu0 %v674
    %952 = vmatpush.bf16.msra.mxu0 %v666
    %953 = vmatpush.bf16.msra.mxu0 %v658
    %954 = vmatpush.bf16.msra.mxu0 %v650
    %955 = vmatpush.bf16.msra.mxu0 %v642
    %956 = vmatmul.bf16.gmra.mxu0 %v126
    %v957 = vpop.f32.mrf.mxu0
    %v958 = vadd.f32 0.0, %v957
    %v959 = vpop.f32.mrf.mxu0
    %960 = vdwg.mxu0
    %961 = vmatpush.bf16.msra.mxu0 %v762
    %962 = vmatpush.bf16.msra.mxu0 %v754
    %963 = vmatpush.bf16.msra.mxu0 %v746
    %964 = vmatpush.bf16.msra.mxu0 %v738
    %965 = vmatpush.bf16.msra.mxu0 %v730
    %966 = vmatpush.bf16.msra.mxu0 %v722
    %967 = vmatpush.bf16.msra.mxu0 %v714
    %968 = vmatpush.bf16.msra.mxu0 %v706
    %969 = vmatmul.bf16.gmra.mxu0 %v127
    %v970 = vpop.f32.mrf.mxu0
    %v971 = vadd.f32 %v958, %v970
    %v972 = vpop.f32.mrf.mxu0
    %973 = vdwg.mxu0
    %974 = vmatpush.bf16.msra.mxu0 %v699
    %975 = vmatpush.bf16.msra.mxu0 %v691
    %976 = vmatpush.bf16.msra.mxu0 %v683
    %977 = vmatpush.bf16.msra.mxu0 %v675
    %978 = vmatpush.bf16.msra.mxu0 %v667
    %979 = vmatpush.bf16.msra.mxu0 %v659
    %980 = vmatpush.bf16.msra.mxu0 %v651
    %981 = vmatpush.bf16.msra.mxu0 %v643
    %982 = vmatmul.bf16.gmra.mxu0 %v126
    %v983 = vpop.f32.mrf.mxu0
    %v984 = vadd.f32 0.0, %v983
    %v985 = vpop.f32.mrf.mxu0
    %986 = vdwg.mxu0
    %987 = vmatpush.bf16.msra.mxu0 %v763
    %988 = vmatpush.bf16.msra.mxu0 %v755
    %989 = vmatpush.bf16.msra.mxu0 %v747
    %990 = vmatpush.bf16.msra.mxu0 %v739
    %991 = vmatpush.bf16.msra.mxu0 %v731
    %992 = vmatpush.bf16.msra.mxu0 %v723
    %993 = vmatpush.bf16.msra.mxu0 %v715
    %994 = vmatpush.bf16.msra.mxu0 %v707
    %995 = vmatmul.bf16.gmra.mxu0 %v127
    %v996 = vpop.f32.mrf.mxu0
    %v997 = vadd.f32 %v984, %v996
    %v998 = vpop.f32.mrf.mxu0
    %999 = vdwg.mxu0
    %1000 = vmatpush.bf16.msra.mxu0 %v700
    %1001 = vmatpush.bf16.msra.mxu0 %v692
    %1002 = vmatpush.bf16.msra.mxu0 %v684
    %1003 = vmatpush.bf16.msra.mxu0 %v676
    %1004 = vmatpush.bf16.msra.mxu0 %v668
    %1005 = vmatpush.bf16.msra.mxu0 %v660
    %1006 = vmatpush.bf16.msra.mxu0 %v652
    %1007 = vmatpush.bf16.msra.mxu0 %v644
    %1008 = vmatmul.bf16.gmra.mxu0 %v126
    %v1009 = vpop.f32.mrf.mxu0
    %v1010 = vadd.f32 0.0, %v1009
    %v1011 = vpop.f32.mrf.mxu0
    %1012 = vdwg.mxu0
    %1013 = vmatpush.bf16.msra.mxu0 %v764
    %1014 = vmatpush.bf16.msra.mxu0 %v756
    %1015 = vmatpush.bf16.msra.mxu0 %v748
    %1016 = vmatpush.bf16.msra.mxu0 %v740
    %1017 = vmatpush.bf16.msra.mxu0 %v732
    %1018 = vmatpush.bf16.msra.mxu0 %v724
    %1019 = vmatpush.bf16.msra.mxu0 %v716
    %1020 = vmatpush.bf16.msra.mxu0 %v708
    %1021 = vmatmul.bf16.gmra.mxu0 %v127
    %v1022 = vpop.f32.mrf.mxu0
    %v1023 = vadd.f32 %v1010, %v1022
    %v1024 = vpop.f32.mrf.mxu0
    %1025 = vdwg.mxu0
    %1026 = vmatpush.bf16.msra.mxu0 %v701
    %1027 = vmatpush.bf16.msra.mxu0 %v693
    %1028 = vmatpush.bf16.msra.mxu0 %v685
    %1029 = vmatpush.bf16.msra.mxu0 %v677
    %1030 = vmatpush.bf16.msra.mxu0 %v669
    %1031 = vmatpush.bf16.msra.mxu0 %v661
    %1032 = vmatpush.bf16.msra.mxu0 %v653
    %1033 = vmatpush.bf16.msra.mxu0 %v645
    %1034 = vmatmul.bf16.gmra.mxu0 %v126
    %v1035 = vpop.f32.mrf.mxu0
    %v1036 = vadd.f32 0.0, %v1035
    %v1037 = vpop.f32.mrf.mxu0
    %1038 = vdwg.mxu0
    %1039 = vmatpush.bf16.msra.mxu0 %v765
    %1040 = vmatpush.bf16.msra.mxu0 %v757
    %1041 = vmatpush.bf16.msra.mxu0 %v749
    %1042 = vmatpush.bf16.msra.mxu0 %v741
    %1043 = vmatpush.bf16.msra.mxu0 %v733
    %1044 = vmatpush.bf16.msra.mxu0 %v725
    %1045 = vmatpush.bf16.msra.mxu0 %v717
    %1046 = vmatpush.bf16.msra.mxu0 %v709
    %1047 = vmatmul.bf16.gmra.mxu0 %v127
    %v1048 = vpop.f32.mrf.mxu0
    %v1049 = vadd.f32 %v1036, %v1048
    %v1050 = vpop.f32.mrf.mxu0
    %1051 = vdwg.mxu0
    %1052 = vmatpush.bf16.msra.mxu0 %v702
    %1053 = vmatpush.bf16.msra.mxu0 %v694
    %1054 = vmatpush.bf16.msra.mxu0 %v686
    %1055 = vmatpush.bf16.msra.mxu0 %v678
    %1056 = vmatpush.bf16.msra.mxu0 %v670
    %1057 = vmatpush.bf16.msra.mxu0 %v662
    %1058 = vmatpush.bf16.msra.mxu0 %v654
    %1059 = vmatpush.bf16.msra.mxu0 %v646
    %1060 = vmatmul.bf16.gmra.mxu0 %v126
    %v1061 = vpop.f32.mrf.mxu0
    %v1062 = vadd.f32 0.0, %v1061
    %v1063 = vpop.f32.mrf.mxu0
    %1064 = vdwg.mxu0
    %1065 = vmatpush.bf16.msra.mxu0 %v766
    %1066 = vmatpush.bf16.msra.mxu0 %v758
    %1067 = vmatpush.bf16.msra.mxu0 %v750
    %1068 = vmatpush.bf16.msra.mxu0 %v742
    %1069 = vmatpush.bf16.msra.mxu0 %v734
    %1070 = vmatpush.bf16.msra.mxu0 %v726
    %1071 = vmatpush.bf16.msra.mxu0 %v718
    %1072 = vmatpush.bf16.msra.mxu0 %v710
    %1073 = vmatmul.bf16.gmra.mxu0 %v127
    %v1074 = vpop.f32.mrf.mxu0
    %v1075 = vadd.f32 %v1062, %v1074
    %v1076 = vpop.f32.mrf.mxu0
    %1077 = vdwg.mxu0
    %1078 = vmatpush.bf16.msra.mxu0 %v703
    %1079 = vmatpush.bf16.msra.mxu0 %v695
    %1080 = vmatpush.bf16.msra.mxu0 %v687
    %1081 = vmatpush.bf16.msra.mxu0 %v679
    %1082 = vmatpush.bf16.msra.mxu0 %v671
    %1083 = vmatpush.bf16.msra.mxu0 %v663
    %1084 = vmatpush.bf16.msra.mxu0 %v655
    %1085 = vmatpush.bf16.msra.mxu0 %v647
    %1086 = vmatmul.bf16.gmra.mxu0 %v126
    %v1087 = vpop.f32.mrf.mxu0
    %v1088 = vadd.f32 0.0, %v1087
    %v1089 = vpop.f32.mrf.mxu0
    %1090 = vdwg.mxu0
    %1091 = vmatpush.bf16.msra.mxu0 %v767
    %1092 = vmatpush.bf16.msra.mxu0 %v759
    %1093 = vmatpush.bf16.msra.mxu0 %v751
    %1094 = vmatpush.bf16.msra.mxu0 %v743
    %1095 = vmatpush.bf16.msra.mxu0 %v735
    %1096 = vmatpush.bf16.msra.mxu0 %v727
    %1097 = vmatpush.bf16.msra.mxu0 %v719
    %1098 = vmatpush.bf16.msra.mxu0 %v711
    %1099 = vmatmul.bf16.gmra.mxu0 %v127
    %v1100 = vpop.f32.mrf.mxu0
    %v1101 = vadd.f32 %v1088, %v1100
    %v1102 = vpop.f32.mrf.mxu0
    %1103 = vdwg.mxu0
    %v1104 = vld [vmem:[#allocation7] sm:$0xff]
    %v1105 = vld [vmem:[#allocation7 + $0x8] sm:$0xff]
    %v1106 = vld [vmem:[#allocation7 + $0x10] sm:$0xff]
    %v1107 = vld [vmem:[#allocation7 + $0x18] sm:$0xff]
    %v1108 = vld [vmem:[#allocation7 + $0x20] sm:$0xff]
    %v1109 = vld [vmem:[#allocation7 + $0x28] sm:$0xff]
    %v1110 = vld [vmem:[#allocation7 + $0x30] sm:$0xff]
    %v1111 = vld [vmem:[#allocation7 + $0x38] sm:$0xff]
    %v1112 = vmul.f32 %v919, %v1104
    %v1113 = vmul.f32 %v945, %v1105
    %v1114 = vmul.f32 %v971, %v1106
    %v1115 = vmul.f32 %v997, %v1107
    %v1116 = vmul.f32 %v1023, %v1108
    %v1117 = vmul.f32 %v1049, %v1109
    %v1118 = vmul.f32 %v1075, %v1110
    %v1119 = vmul.f32 %v1101, %v1111
    %v1120 = vadd.f32 %v1112, %v1113
    %v1121 = vadd.f32 %v1116, %v1117
    %v1122 = vadd.f32 %v1120, %v1114
    %v1123 = vadd.f32 %v1121, %v1118
    %v1124 = vadd.f32 %v1122, %v1115
    %v1125 = vadd.f32 %v1123, %v1119
    %v1126 = vld [vmem:[#allocation3 + $0x10] sm:$0xff]
    %v1127 = vld [vmem:[#allocation3 + $0x18] sm:$0xff]
    %v1128 = vadd.f32 %v1124, %v1126
    %v1129 = vadd.f32 %v1125, %v1127
    %v1130 = vmax.f32 %v1128, 0.0
    %v1131 = vmax.f32 %v1129, 0.0
    %v1132 = vpack.c.bf16 %v1131, %v1130
    %v1133 = vld [vmem:[%s5] sm:$0xff]
    %v1134 = vld [vmem:[%s5 + $0x8] sm:$0xff]
    %v1135 = vld [vmem:[%s5 + $0x10] sm:$0xff]
    %v1136 = vld [vmem:[%s5 + $0x18] sm:$0xff]
    %v1137 = vld [vmem:[%s5 + $0x20] sm:$0xff]
    %v1138 = vld [vmem:[%s5 + $0x28] sm:$0xff]
    %v1139 = vld [vmem:[%s5 + $0x30] sm:$0xff]
    %v1140 = vld [vmem:[%s5 + $0x38] sm:$0xff]
    %v1141 = vld [vmem:[%s5 + $0x40] sm:$0xff]
    %v1142 = vld [vmem:[%s5 + $0x48] sm:$0xff]
    %v1143 = vld [vmem:[%s5 + $0x50] sm:$0xff]
    %v1144 = vld [vmem:[%s5 + $0x58] sm:$0xff]
    %v1145 = vld [vmem:[%s5 + $0x60] sm:$0xff]
    %v1146 = vld [vmem:[%s5 + $0x68] sm:$0xff]
    %v1147 = vld [vmem:[%s5 + $0x70] sm:$0xff]
    %v1148 = vld [vmem:[%s5 + $0x78] sm:$0xff]
    %v1165 = vunpack.c.l.b16 %v1133
    %v1166 = vunpack.c.h.b16 %v1133
    %v1167 = vunpack.c.l.b16 %v1134
    %v1168 = vunpack.c.h.b16 %v1134
    %v1169 = vunpack.c.l.b16 %v1135
    %v1170 = vunpack.c.h.b16 %v1135
    %v1171 = vunpack.c.l.b16 %v1136
    %v1172 = vunpack.c.h.b16 %v1136
    %v1173 = vunpack.c.l.b16 %v1137
    %v1174 = vunpack.c.h.b16 %v1137
    %v1175 = vunpack.c.l.b16 %v1138
    %v1176 = vunpack.c.h.b16 %v1138
    %v1177 = vunpack.c.l.b16 %v1139
    %v1178 = vunpack.c.h.b16 %v1139
    %v1179 = vunpack.c.l.b16 %v1140
    %v1180 = vunpack.c.h.b16 %v1140
    %v1181 = vunpack.c.l.b16 %v1141
    %v1182 = vunpack.c.h.b16 %v1141
    %v1183 = vunpack.c.l.b16 %v1142
    %v1184 = vunpack.c.h.b16 %v1142
    %v1185 = vunpack.c.l.b16 %v1143
    %v1186 = vunpack.c.h.b16 %v1143
    %v1187 = vunpack.c.l.b16 %v1144
    %v1188 = vunpack.c.h.b16 %v1144
    %v1189 = vunpack.c.l.b16 %v1145
    %v1190 = vunpack.c.h.b16 %v1145
    %v1191 = vunpack.c.l.b16 %v1146
    %v1192 = vunpack.c.h.b16 %v1146
    %v1193 = vunpack.c.l.b16 %v1147
    %v1194 = vunpack.c.h.b16 %v1147
    %v1195 = vunpack.c.l.b16 %v1148
    %v1196 = vunpack.c.h.b16 %v1148
    %v1197 = vpack.c.b16 %v1167, %v1165
    %v1198 = vpack.c.b16 %v1168, %v1166
    %v1199 = vpack.c.b16 %v1171, %v1169
    %v1200 = vpack.c.b16 %v1172, %v1170
    %v1201 = vpack.c.b16 %v1175, %v1173
    %v1202 = vpack.c.b16 %v1176, %v1174
    %v1203 = vpack.c.b16 %v1179, %v1177
    %v1204 = vpack.c.b16 %v1180, %v1178
    %v1205 = vpack.c.b16 %v1183, %v1181
    %v1206 = vpack.c.b16 %v1184, %v1182
    %v1207 = vpack.c.b16 %v1187, %v1185
    %v1208 = vpack.c.b16 %v1188, %v1186
    %v1209 = vpack.c.b16 %v1191, %v1189
    %v1210 = vpack.c.b16 %v1192, %v1190
    %v1211 = vpack.c.b16 %v1195, %v1193
    %v1212 = vpack.c.b16 %v1196, %v1194
    %1229 = vmatpush.bf16.msra.mxu0 %v1211
    %1230 = vmatpush.bf16.msra.mxu0 %v1209
    %1231 = vmatpush.bf16.msra.mxu0 %v1207
    %1232 = vmatpush.bf16.msra.mxu0 %v1205
    %1233 = vmatpush.bf16.msra.mxu0 %v1203
    %1234 = vmatpush.bf16.msra.mxu0 %v1201
    %1235 = vmatpush.bf16.msra.mxu0 %v1199
    %1236 = vmatpush.bf16.msra.mxu0 %v1197
    %1237 = vmatmul.bf16.gmra.mxu0 %v1132
    %v1238 = vpop.f32.mrf.mxu0
    %v1239 = vadd.f32 0.0, %v1238
    %v1240 = vpop.f32.mrf.mxu0
    %1241 = vdwg.mxu0
    %1242 = vmatpush.bf16.msra.mxu0 %v1212
    %1243 = vmatpush.bf16.msra.mxu0 %v1210
    %1244 = vmatpush.bf16.msra.mxu0 %v1208
    %1245 = vmatpush.bf16.msra.mxu0 %v1206
    %1246 = vmatpush.bf16.msra.mxu0 %v1204
    %1247 = vmatpush.bf16.msra.mxu0 %v1202
    %1248 = vmatpush.bf16.msra.mxu0 %v1200
    %1249 = vmatpush.bf16.msra.mxu0 %v1198
    %1250 = vmatmul.bf16.gmra.mxu0 %v1132
    %v1251 = vpop.f32.mrf.mxu0
    %v1252 = vadd.f32 0.0, %v1251
    %v1253 = vpop.f32.mrf.mxu0
    %1254 = vdwg.mxu0
    %v1255 = vld [vmem:[%s5 + $0x80] sm:$0xff]
    %v1256 = vld [vmem:[%s5 + $0x88] sm:$0xff]
    %v1257 = vld [vmem:[%s5 + $0x90] sm:$0xff]
    %v1258 = vld [vmem:[%s5 + $0x98] sm:$0xff]
    %v1259 = vld [vmem:[%s5 + $0xa0] sm:$0xff]
    %v1260 = vld [vmem:[%s5 + $0xa8] sm:$0xff]
    %v1261 = vld [vmem:[%s5 + $0xb0] sm:$0xff]
    %v1262 = vld [vmem:[%s5 + $0xb8] sm:$0xff]
    %v1263 = vld [vmem:[%s5 + $0xc0] sm:$0xff]
    %v1264 = vld [vmem:[%s5 + $0xc8] sm:$0xff]
    %v1265 = vld [vmem:[%s5 + $0xd0] sm:$0xff]
    %v1266 = vld [vmem:[%s5 + $0xd8] sm:$0xff]
    %v1267 = vld [vmem:[%s5 + $0xe0] sm:$0xff]
    %v1268 = vld [vmem:[%s5 + $0xe8] sm:$0xff]
    %v1269 = vld [vmem:[%s5 + $0xf0] sm:$0xff]
    %v1270 = vld [vmem:[%s5 + $0xf8] sm:$0xff]
    %v1272 = vunpack.c.h.b16 %v1132
    %v1273 = vpack.c.b16 %v1272, %v1272
    %v1291 = vunpack.c.l.b16 %v1255
    %v1292 = vunpack.c.h.b16 %v1255
    %v1293 = vunpack.c.l.b16 %v1256
    %v1294 = vunpack.c.h.b16 %v1256
    %v1295 = vunpack.c.l.b16 %v1257
    %v1296 = vunpack.c.h.b16 %v1257
    %v1297 = vunpack.c.l.b16 %v1258
    %v1298 = vunpack.c.h.b16 %v1258
    %v1299 = vunpack.c.l.b16 %v1259
    %v1300 = vunpack.c.h.b16 %v1259
    %v1301 = vunpack.c.l.b16 %v1260
    %v1302 = vunpack.c.h.b16 %v1260
    %v1303 = vunpack.c.l.b16 %v1261
    %v1304 = vunpack.c.h.b16 %v1261
    %v1305 = vunpack.c.l.b16 %v1262
    %v1306 = vunpack.c.h.b16 %v1262
    %v1307 = vunpack.c.l.b16 %v1263
    %v1308 = vunpack.c.h.b16 %v1263
    %v1309 = vunpack.c.l.b16 %v1264
    %v1310 = vunpack.c.h.b16 %v1264
    %v1311 = vunpack.c.l.b16 %v1265
    %v1312 = vunpack.c.h.b16 %v1265
    %v1313 = vunpack.c.l.b16 %v1266
    %v1314 = vunpack.c.h.b16 %v1266
    %v1315 = vunpack.c.l.b16 %v1267
    %v1316 = vunpack.c.h.b16 %v1267
    %v1317 = vunpack.c.l.b16 %v1268
    %v1318 = vunpack.c.h.b16 %v1268
    %v1319 = vunpack.c.l.b16 %v1269
    %v1320 = vunpack.c.h.b16 %v1269
    %v1321 = vunpack.c.l.b16 %v1270
    %v1322 = vunpack.c.h.b16 %v1270
    %v1323 = vpack.c.b16 %v1293, %v1291
    %v1324 = vpack.c.b16 %v1294, %v1292
    %v1325 = vpack.c.b16 %v1297, %v1295
    %v1326 = vpack.c.b16 %v1298, %v1296
    %v1327 = vpack.c.b16 %v1301, %v1299
    %v1328 = vpack.c.b16 %v1302, %v1300
    %v1329 = vpack.c.b16 %v1305, %v1303
    %v1330 = vpack.c.b16 %v1306, %v1304
    %v1331 = vpack.c.b16 %v1309, %v1307
    %v1332 = vpack.c.b16 %v1310, %v1308
    %v1333 = vpack.c.b16 %v1313, %v1311
    %v1334 = vpack.c.b16 %v1314, %v1312
    %v1335 = vpack.c.b16 %v1317, %v1315
    %v1336 = vpack.c.b16 %v1318, %v1316
    %v1337 = vpack.c.b16 %v1321, %v1319
    %v1338 = vpack.c.b16 %v1322, %v1320
    %1355 = vmatpush.bf16.msra.mxu0 %v1337
    %1356 = vmatpush.bf16.msra.mxu0 %v1335
    %1357 = vmatpush.bf16.msra.mxu0 %v1333
    %1358 = vmatpush.bf16.msra.mxu0 %v1331
    %1359 = vmatpush.bf16.msra.mxu0 %v1329
    %1360 = vmatpush.bf16.msra.mxu0 %v1327
    %1361 = vmatpush.bf16.msra.mxu0 %v1325
    %1362 = vmatpush.bf16.msra.mxu0 %v1323
    %1363 = vmatmul.bf16.gmra.mxu0 %v1273
    %v1364 = vpop.f32.mrf.mxu0
    %v1365 = vadd.f32 0.0, %v1364
    %v1366 = vpop.f32.mrf.mxu0
    %1367 = vdwg.mxu0
    %1368 = vmatpush.bf16.msra.mxu0 %v1338
    %1369 = vmatpush.bf16.msra.mxu0 %v1336
    %1370 = vmatpush.bf16.msra.mxu0 %v1334
    %1371 = vmatpush.bf16.msra.mxu0 %v1332
    %1372 = vmatpush.bf16.msra.mxu0 %v1330
    %1373 = vmatpush.bf16.msra.mxu0 %v1328
    %1374 = vmatpush.bf16.msra.mxu0 %v1326
    %1375 = vmatpush.bf16.msra.mxu0 %v1324
    %1376 = vmatmul.bf16.gmra.mxu0 %v1273
    %v1377 = vpop.f32.mrf.mxu0
    %v1378 = vadd.f32 0.0, %v1377
    %v1379 = vpop.f32.mrf.mxu0
    %1380 = vdwg.mxu0
    %v1381 = vld [vmem:[%s6] sm:$0xff]
    %v1382 = vld [vmem:[%s6 + $0x8] sm:$0xff]
    %v1383 = vld [vmem:[#allocation3 + $0x20] sm:$0xff]
    %v1384 = vld [vmem:[#allocation3 + $0x28] sm:$0xff]
    %v1385 = vld [vmem:[#allocation3 + $0x30] sm:$0xff]
    %v1386 = vld [vmem:[#allocation3 + $0x38] sm:$0xff]
    %v1388 = vsel %vm82, %v1381, 0
    %v1391 = vsel %vm82, %v1382, 0
    %1393 = vmatpush.msra.mxu0 0.0
    %1394 = vmatpush.msra.mxu0 0.0
    %1395 = vmatpush.msra.mxu0 0.0
    %1396 = vmatpush.msra.mxu0 0.0
    %1397 = vmatpush.msra.mxu0 0.0
    %1398 = vmatpush.msra.mxu0 0.0
    %1399 = vmatpush.msra.mxu0 0.0
    %1400 = vmatpush.msra.mxu0 0.0
    %1401 = vmatpush.msra.mxu0 0.0
    %1402 = vmatpush.msra.mxu0 0.0
    %1403 = vmatpush.msra.mxu0 0.0
    %1404 = vmatpush.msra.mxu0 0.0
    %1405 = vmatpush.msra.mxu0 0.0
    %1406 = vmatpush.msra.mxu0 0.0
    %1407 = vmatpush.msra.mxu0 %v1365
    %1408 = vmatpush.msra.mxu0 %v1239
    %1409 = vmatmul.f32.gmra.mxu0 %v1388
    %v1410 = vpop.f32.mrf.mxu0
    %v1411 = vadd.f32 %v1383, %v1410
    %1412 = vmatmul.f32.gmra.mxu0 %v1391
    %v1413 = vpop.f32.mrf.mxu0
    %v1414 = vadd.f32 %v1385, %v1413
    %1415 = vdwg.mxu0
    %1416 = vmatpush.msra.mxu0 0.0
    %1417 = vmatpush.msra.mxu0 0.0
    %1418 = vmatpush.msra.mxu0 0.0
    %1419 = vmatpush.msra.mxu0 0.0
    %1420 = vmatpush.msra.mxu0 0.0
    %1421 = vmatpush.msra.mxu0 0.0
    %1422 = vmatpush.msra.mxu0 0.0
    %1423 = vmatpush.msra.mxu0 0.0
    %1424 = vmatpush.msra.mxu0 0.0
    %1425 = vmatpush.msra.mxu0 0.0
    %1426 = vmatpush.msra.mxu0 0.0
    %1427 = vmatpush.msra.mxu0 0.0
    %1428 = vmatpush.msra.mxu0 0.0
    %1429 = vmatpush.msra.mxu0 0.0
    %1430 = vmatpush.msra.mxu0 %v1378
    %1431 = vmatpush.msra.mxu0 %v1252
    %1432 = vmatmul.f32.gmra.mxu0 %v1388
    %v1433 = vpop.f32.mrf.mxu0
    %v1434 = vadd.f32 %v1384, %v1433
    %1435 = vmatmul.f32.gmra.mxu0 %v1391
    %v1436 = vpop.f32.mrf.mxu0
    %v1437 = vadd.f32 %v1386, %v1436
    %1438 = vdwg.mxu0
    %v1439 = vadd.f32 %v1411, %v75
    %v1440 = vadd.f32 %v1434, %v76
    %v1441 = vadd.f32 %v1414, %v77
    %v1442 = vadd.f32 %v1437, %v78
    %s1443 = sld [smem:[#allocation2]]
    %vm1444 = vcmp.ge.f32.partialorder %v1439, 0.0
    %vm1445 = vcmp.ge.f32.partialorder %v1440, 0.0
    %vm1446 = vcmp.ge.f32.partialorder %v1441, 0.0
    %vm1447 = vcmp.ge.f32.partialorder %v1442, 0.0
    %v1448 = vstv %s1443
    %v1449 = vmul.f32 %v1448, %v1439
    %v1450 = vmul.f32 %v1448, %v1440
    %v1451 = vmul.f32 %v1448, %v1441
    %v1452 = vmul.f32 %v1448, %v1442
    %v1453 = vsel %vm1444, %v1439, %v1449
    %v1454 = vsel %vm1445, %v1440, %v1450
    %v1455 = vsel %vm1446, %v1441, %v1451
    %v1456 = vsel %vm1447, %v1442, %v1452
    %1457 = vst [vmem:[%s8] sm:$0xff] %v1453
    %1458 = vst [vmem:[%s8 + $0x8] sm:$0xff] %v1454
    %1459 = vst [vmem:[%s8 + $0x10] sm:$0xff] %v1455
    %1460 = vst [vmem:[%s8 + $0x18] sm:$0xff] %v1456
    // Predicated region
    $region46: #{siunit_pallas.1} parent=1 // pred_check
      _
    $region47: #{siunit_pallas.1} parent=1 // pred_check_branch
      %1462 = sbr.rel (0) target = $region49
    $region48: #{siunit_pallas.1} parent=1 // pred_region
      _
    $region49: #{siunit_pallas.1} parent=1 // pred_fallthru
      _
    // Predicated region
    $region50: #{siunit_pallas.1} parent=1 // pred_check
      _
    $region51: #{siunit_pallas.1} parent=1 // pred_check_branch
      %1464 = sbr.rel (0) target = $region53
    $region52: #{siunit_pallas.1} parent=1 // pred_region
      _
    $region53: #{siunit_pallas.1} parent=1 // pred_fallthru
      _
    %1465 = vsyncpa [#allocation4], 1
    %1466 = vsyncpa [#allocation6], 1

</llo_original>
